<compile_context>
chip_gen: v5e
topology: v5e:2x2
jax: 0.10.0
libtpu: 0.0.40
codegen_flags: <defaults>
</compile_context>

<pallas_src>
import jax
import jax.numpy as jnp
from jax import lax
from jax.experimental import pallas as pl
from jax.experimental.pallas import tpu as pltpu


def _make_basic_block_kernel(H, W, C):
    P = H * W
    G = W + 1                     # guard width: max |tap shift| = W + 1
    PP = P + 2 * G
    taps = [(dy, dx) for dy in (-1, 0, 1) for dx in (-1, 0, 1)]

    def kernel(cmask_ref, x_ref, w1_ref, sc1_ref, sh1_ref,
               w2_ref, sc2_ref, sh2_ref, out_ref, pad_ref):
        # cmask_ref : (2, 1, P)  [0] valid lanes for dx=-1 taps, [1] for dx=+1
        # x_ref     : (1, C, P)  one image, channel-major, spatial flattened
        # w1_ref    : (9, C, C)  conv1 taps, t = 3*(dy+1)+(dx+1), each (Cout, Cin)
        # sc*/sh*   : (C, 1)     fused BN scale / shift
        # out_ref   : (1, C, P)
        # pad_ref   : (C, PP)    VMEM scratch: [zero guard | image | zero guard]

        # Zero only the guard bands (interior is fully overwritten before use).
        # Done every step so it stays correct when the parallel grid axis is
        # split across TensorCores (each core has its own scratch).
        zero_guard = jnp.zeros((C, G), jnp.float32)
        pad_ref[:, 0:G] = zero_guard
        pad_ref[:, G + P:PP] = zero_guard

        x = x_ref[0].astype(jnp.float32)                  # (C, P), lane-dense
        w1 = w1_ref[...].astype(jnp.float32)              # hoisted weight loads
        w2 = w2_ref[...].astype(jnp.float32)
        mask_m1 = cmask_ref[0].astype(jnp.float32)        # (1, P)
        mask_p1 = cmask_ref[1].astype(jnp.float32)        # (1, P)

        def conv3x3(inp, w):
            # 3x3 "same" conv as 9 shifted MXU matmuls with f32 accumulation.
            pad_ref[:, G:G + P] = inp
            acc = jnp.zeros((C, P), jnp.float32)
            for t, (dy, dx) in enumerate(taps):
                s = dy * W + dx
                xs = pad_ref[:, G + s:G + s + P]          # out[:,p] = inp[:,p+s]
                if dx == -1:                              # kill column wrap
                    xs = xs * mask_m1
                elif dx == 1:
                    xs = xs * mask_p1
                acc = acc + jnp.dot(w[t], xs,
                                    preferred_element_type=jnp.float32)
            return acc

        y1 = jnp.maximum(conv3x3(x, w1) * sc1_ref[...] + sh1_ref[...], 0.0)
        y2 = conv3x3(y1, w2)
        out = jnp.maximum(y2 * sc2_ref[...] + sh2_ref[...] + x, 0.0)
        out_ref[0] = out.astype(out_ref.dtype)

    return kernel


def basic_block_pallas(x_nchw, w1_taps, sc1, sh1, w2_taps, sc2, sh2):
    """x_nchw: (N, C, H, W) -> (N, C, H, W); inplanes == planes (no downsample)."""
    N, Cin, H, W = x_nchw.shape
    Cout = w1_taps.shape[1]
    assert Cin == Cout, "residual add requires inplanes == planes (downsample=None)"
    C = Cin
    P = H * W

    x_flat = x_nchw.reshape(N, C, P)

    # Lane masks removing the column wrap-around of flattened-spatial shifts.
    col = jnp.arange(P, dtype=jnp.int32) % W
    cmask = jnp.stack([(col != 0), (col != W - 1)]).astype(jnp.float32)
    cmask = cmask.reshape(2, 1, P)

    sc1b = sc1.reshape(C, 1).astype(jnp.float32)
    sh1b = sh1.reshape(C, 1).astype(jnp.float32)
    sc2b = sc2.reshape(C, 1).astype(jnp.float32)
    sh2b = sh2.reshape(C, 1).astype(jnp.float32)

    kernel = _make_basic_block_kernel(H, W, C)

    out_flat = pl.pallas_call(
        kernel,
        out_shape=jax.ShapeDtypeStruct((N, C, P), x_nchw.dtype),
        grid_spec=pltpu.PrefetchScalarGridSpec(
            num_scalar_prefetch=0,
            grid=(N,),
            in_specs=[
                pl.BlockSpec((2, 1, P), lambda n: (0, 0, 0)),    # column masks
                pl.BlockSpec((1, C, P), lambda n: (n, 0, 0)),    # x (also identity)
                pl.BlockSpec((9, C, C), lambda n: (0, 0, 0)),    # conv1 taps
                pl.BlockSpec((C, 1), lambda n: (0, 0)),          # bn1 scale
                pl.BlockSpec((C, 1), lambda n: (0, 0)),          # bn1 shift
                pl.BlockSpec((9, C, C), lambda n: (0, 0, 0)),    # conv2 taps
                pl.BlockSpec((C, 1), lambda n: (0, 0)),          # bn2 scale
                pl.BlockSpec((C, 1), lambda n: (0, 0)),          # bn2 shift
            ],
            out_specs=pl.BlockSpec((1, C, P), lambda n: (n, 0, 0)),
            scratch_shapes=[pltpu.VMEM((C, P + 2 * (W + 1)), jnp.float32)],
        ),
        compiler_params=pltpu.CompilerParams(
            dimension_semantics=("parallel",)),
    )(cmask, x_flat, w1_taps, sc1b, sh1b, w2_taps, sc2b, sh2b)

    return out_flat.reshape(N, C, H, W)


def ref_basic_block(x, w1_oihw, sc1, sh1, w2_oihw, sc2, sh2):
    """Pure-JAX reference (NCHW, same inference-mode BN semantics)."""
    dn = ('NCHW', 'OIHW', 'NCHW')
    out = lax.conv_general_dilated(x, w1_oihw, (1, 1), ((1, 1), (1, 1)),
                                   dimension_numbers=dn)
    out = out * sc1[None, :, None, None] + sh1[None, :, None, None]
    out = jnp.maximum(out, 0.0)
    out = lax.conv_general_dilated(out, w2_oihw, (1, 1), ((1, 1), (1, 1)),
                                   dimension_numbers=dn)
    out = out * sc2[None, :, None, None] + sh2[None, :, None, None]
    out = out + x
    return jnp.maximum(out, 0.0)


if __name__ == "__main__":
    # Small shapes consistent with the module: batch=2, inplanes=planes=4, 16x16
    N, C, H, W = 2, 4, 16, 16
    inplanes = planes = C
    eps = 1e-5

    key = jax.random.PRNGKey(0)
    keys = jax.random.split(key, 10)

    x = jax.random.normal(keys[0], (N, inplanes, H, W), jnp.float32)

    # conv weights (PyTorch OIHW layout), bias=False
    w1_oihw = jax.random.normal(keys[1], (planes, inplanes, 3, 3), jnp.float32) * 0.2
    w2_oihw = jax.random.normal(keys[2], (planes, planes, 3, 3), jnp.float32) * 0.2

    # BatchNorm parameters (inference mode, fused into scale/shift)
    g1 = jax.random.uniform(keys[3], (planes,), jnp.float32, 0.5, 1.5)
    b1 = jax.random.normal(keys[4], (planes,), jnp.float32) * 0.1
    rm1 = jax.random.normal(keys[5], (planes,), jnp.float32) * 0.1
    rv1 = jax.random.uniform(keys[6], (planes,), jnp.float32, 0.5, 1.5)
    g2 = jax.random.uniform(keys[7], (planes,), jnp.float32, 0.5, 1.5)
    b2 = jax.random.normal(keys[8], (planes,), jnp.float32) * 0.1
    rm2 = jax.random.normal(keys[9], (planes,), jnp.float32) * 0.1
    rv2 = jax.random.uniform(jax.random.PRNGKey(42), (planes,), jnp.float32, 0.5, 1.5)

    sc1 = g1 / jnp.sqrt(rv1 + eps)
    sh1 = b1 - rm1 * sc1
    sc2 = g2 / jnp.sqrt(rv2 + eps)
    sh2 = b2 - rm2 * sc2

    # Re-pack conv weights for the kernel: (O, I, KH, KW) -> (KH*KW, O, I)
    w1_taps = jnp.transpose(w1_oihw, (2, 3, 0, 1)).reshape(9, planes, inplanes)
    w2_taps = jnp.transpose(w2_oihw, (2, 3, 0, 1)).reshape(9, planes, planes)

    out = basic_block_pallas(x, w1_taps, sc1, sh1, w2_taps, sc2, sh2)
    out = jax.block_until_ready(out)

    ref = ref_basic_block(x, w1_oihw, sc1, sh1, w2_oihw, sc2, sh2)
    ref = jax.block_until_ready(ref)

    assert out.shape == (N, planes, H, W), out.shape
    assert jnp.allclose(out, ref, rtol=1e-3, atol=1e-3), \
        f"max abs err = {float(jnp.max(jnp.abs(out - ref)))}"

    print("KERNEL_OK")
</pallas_src>

<mosaic_0001>
module attributes {stable_mosaic.version = 11 : i64} {
  func.func @kernel(%arg0: i32, %arg1: memref<2x1x256xf32, #tpu.memory_space<vmem>>, %arg2: memref<1x4x256xf32, #tpu.memory_space<vmem>>, %arg3: memref<9x4x4xf32, #tpu.memory_space<vmem>>, %arg4: memref<4x1xf32, #tpu.memory_space<vmem>>, %arg5: memref<4x1xf32, #tpu.memory_space<vmem>>, %arg6: memref<9x4x4xf32, #tpu.memory_space<vmem>>, %arg7: memref<4x1xf32, #tpu.memory_space<vmem>>, %arg8: memref<4x1xf32, #tpu.memory_space<vmem>>, %arg9: memref<1x4x256xf32, #tpu.memory_space<vmem>>, %arg10: memref<4x290xf32, #tpu.memory_space<vmem>>) attributes {dimension_semantics = [#tpu.dimension_semantics<parallel>], iteration_bounds = array<i64: 2>, scalar_prefetch = 0 : i64, scratch_operands = 1 : i64, tpu.core_type = #tpu.core_type<tc>, window_params = [{pipeline_mode = #tpu.pipeline_mode<synchronous>, transform_indices = @transform_0, window_bounds = array<i64: 2, 1, 256>}, {transform_indices = @transform_1, window_bounds = array<i64: 1, 4, 256>}, {pipeline_mode = #tpu.pipeline_mode<synchronous>, transform_indices = @transform_2, window_bounds = array<i64: 9, 4, 4>}, {pipeline_mode = #tpu.pipeline_mode<synchronous>, transform_indices = @transform_3, window_bounds = array<i64: 4, 1>}, {pipeline_mode = #tpu.pipeline_mode<synchronous>, transform_indices = @transform_4, window_bounds = array<i64: 4, 1>}, {pipeline_mode = #tpu.pipeline_mode<synchronous>, transform_indices = @transform_5, window_bounds = array<i64: 9, 4, 4>}, {pipeline_mode = #tpu.pipeline_mode<synchronous>, transform_indices = @transform_6, window_bounds = array<i64: 4, 1>}, {pipeline_mode = #tpu.pipeline_mode<synchronous>, transform_indices = @transform_7, window_bounds = array<i64: 4, 1>}, {transform_indices = @transform_8, window_bounds = array<i64: 1, 4, 256>}]} {
    %cst = arith.constant 0.000000e+00 : f32
    %0 = vector.broadcast %cst : f32 to vector<4x17xf32>
    %c0 = arith.constant 0 : index
    %c0_0 = arith.constant 0 : index
    %1 = vector.load %arg10[%c0, %c0_0] : memref<4x290xf32, #tpu.memory_space<vmem>>, vector<4x17xf32>
    tpu.vector_store %arg10[%c0, %c0_0], %0 {strides = array<i32>} : memref<4x290xf32, #tpu.memory_space<vmem>>, vector<4x17xf32>,
    %c0_1 = arith.constant 0 : index
    %c273 = arith.constant 273 : index
    %2 = vector.load %arg10[%c0_1, %c273] : memref<4x290xf32, #tpu.memory_space<vmem>>, vector<4x17xf32>
    tpu.vector_store %arg10[%c0_1, %c273], %0 {strides = array<i32>} : memref<4x290xf32, #tpu.memory_space<vmem>>, vector<4x17xf32>,
    %c0_2 = arith.constant 0 : index
    %c0_3 = arith.constant 0 : index
    %c0_4 = arith.constant 0 : index
    %3 = vector.load %arg2[%c0_2, %c0_3, %c0_4] : memref<1x4x256xf32, #tpu.memory_space<vmem>>, vector<1x4x256xf32>
    %4 = vector.shape_cast %3 : vector<1x4x256xf32> to vector<4x256xf32>
    %c0_5 = arith.constant 0 : index
    %c0_6 = arith.constant 0 : index
    %c0_7 = arith.constant 0 : index
    %5 = vector.load %arg3[%c0_5, %c0_6, %c0_7] : memref<9x4x4xf32, #tpu.memory_space<vmem>>, vector<9x4x4xf32>
    %c0_8 = arith.constant 0 : index
    %c0_9 = arith.constant 0 : index
    %c0_10 = arith.constant 0 : index
    %6 = vector.load %arg6[%c0_8, %c0_9, %c0_10] : memref<9x4x4xf32, #tpu.memory_space<vmem>>, vector<9x4x4xf32>
    %c0_11 = arith.constant 0 : index
    %c0_12 = arith.constant 0 : index
    %c0_13 = arith.constant 0 : index
    %7 = vector.load %arg1[%c0_11, %c0_12, %c0_13] : memref<2x1x256xf32, #tpu.memory_space<vmem>>, vector<1x1x256xf32>
    %8 = vector.shape_cast %7 : vector<1x1x256xf32> to vector<1x256xf32>
    %c1 = arith.constant 1 : index
    %c0_14 = arith.constant 0 : index
    %c0_15 = arith.constant 0 : index
    %9 = vector.load %arg1[%c1, %c0_14, %c0_15] : memref<2x1x256xf32, #tpu.memory_space<vmem>>, vector<1x1x256xf32>
    %10 = vector.shape_cast %9 : vector<1x1x256xf32> to vector<1x256xf32>
    %c0_16 = arith.constant 0 : index
    %c17 = arith.constant 17 : index
    %11 = vector.load %arg10[%c0_16, %c17] : memref<4x290xf32, #tpu.memory_space<vmem>>, vector<4x256xf32>
    tpu.vector_store %arg10[%c0_16, %c17], %4 {strides = array<i32>} : memref<4x290xf32, #tpu.memory_space<vmem>>, vector<4x256xf32>,
    %cst_17 = arith.constant 0.000000e+00 : f32
    %12 = vector.broadcast %cst_17 : f32 to vector<4x256xf32>
    %c0_18 = arith.constant 0 : index
    %c0_19 = arith.constant 0 : index
    %13 = vector.load %arg10[%c0_18, %c0_19] : memref<4x290xf32, #tpu.memory_space<vmem>>, vector<4x256xf32>
    %14 = vector.broadcast %8 : vector<1x256xf32> to vector<4x256xf32>
    %15 = arith.mulf %13, %14 : vector<4x256xf32>
    %16 = vector.extract_strided_slice %5 {offsets = [0, 0, 0], sizes = [1, 4, 4], strides = [1, 1, 1]} : vector<9x4x4xf32> to vector<1x4x4xf32>
    %17 = vector.shape_cast %16 : vector<1x4x4xf32> to vector<4x4xf32>
    %cst_20 = arith.constant dense<0.000000e+00> : vector<4x256xf32>
    %18 = tpu.matmul %17, %15, %cst_20 {dimension_numbers = #tpu.dot_dimension_numbers<[1], [0], [0], [1], [0, 0, 1, 1], [], []>} : vector<4x4xf32>, vector<4x256xf32>, vector<4x256xf32> -> vector<4x256xf32>
    %19 = arith.addf %12, %18 : vector<4x256xf32>
    %c0_21 = arith.constant 0 : index
    %c1_22 = arith.constant 1 : index
    %20 = vector.load %arg10[%c0_21, %c1_22] : memref<4x290xf32, #tpu.memory_space<vmem>>, vector<4x256xf32>
    %21 = vector.extract_strided_slice %5 {offsets = [1, 0, 0], sizes = [1, 4, 4], strides = [1, 1, 1]} : vector<9x4x4xf32> to vector<1x4x4xf32>
    %22 = vector.shape_cast %21 : vector<1x4x4xf32> to vector<4x4xf32>
    %cst_23 = arith.constant dense<0.000000e+00> : vector<4x256xf32>
    %23 = tpu.matmul %22, %20, %cst_23 {dimension_numbers = #tpu.dot_dimension_numbers<[1], [0], [0], [1], [0, 0, 1, 1], [], []>} : vector<4x4xf32>, vector<4x256xf32>, vector<4x256xf32> -> vector<4x256xf32>
    %24 = arith.addf %19, %23 : vector<4x256xf32>
    %c0_24 = arith.constant 0 : index
    %c2 = arith.constant 2 : index
    %25 = vector.load %arg10[%c0_24, %c2] : memref<4x290xf32, #tpu.memory_space<vmem>>, vector<4x256xf32>
    %26 = vector.broadcast %10 : vector<1x256xf32> to vector<4x256xf32>
    %27 = arith.mulf %25, %26 : vector<4x256xf32>
    %28 = vector.extract_strided_slice %5 {offsets = [2, 0, 0], sizes = [1, 4, 4], strides = [1, 1, 1]} : vector<9x4x4xf32> to vector<1x4x4xf32>
    %29 = vector.shape_cast %28 : vector<1x4x4xf32> to vector<4x4xf32>
    %cst_25 = arith.constant dense<0.000000e+00> : vector<4x256xf32>
    %30 = tpu.matmul %29, %27, %cst_25 {dimension_numbers = #tpu.dot_dimension_numbers<[1], [0], [0], [1], [0, 0, 1, 1], [], []>} : vector<4x4xf32>, vector<4x256xf32>, vector<4x256xf32> -> vector<4x256xf32>
    %31 = arith.addf %24, %30 : vector<4x256xf32>
    %c0_26 = arith.constant 0 : index
    %c16 = arith.constant 16 : index
    %32 = vector.load %arg10[%c0_26, %c16] : memref<4x290xf32, #tpu.memory_space<vmem>>, vector<4x256xf32>
    %33 = vector.broadcast %8 : vector<1x256xf32> to vector<4x256xf32>
    %34 = arith.mulf %32, %33 : vector<4x256xf32>
    %35 = vector.extract_strided_slice %5 {offsets = [3, 0, 0], sizes = [1, 4, 4], strides = [1, 1, 1]} : vector<9x4x4xf32> to vector<1x4x4xf32>
    %36 = vector.shape_cast %35 : vector<1x4x4xf32> to vector<4x4xf32>
    %cst_27 = arith.constant dense<0.000000e+00> : vector<4x256xf32>
    %37 = tpu.matmul %36, %34, %cst_27 {dimension_numbers = #tpu.dot_dimension_numbers<[1], [0], [0], [1], [0, 0, 1, 1], [], []>} : vector<4x4xf32>, vector<4x256xf32>, vector<4x256xf32> -> vector<4x256xf32>
    %38 = arith.addf %31, %37 : vector<4x256xf32>
    %c0_28 = arith.constant 0 : index
    %c17_29 = arith.constant 17 : index
    %39 = vector.load %arg10[%c0_28, %c17_29] : memref<4x290xf32, #tpu.memory_space<vmem>>, vector<4x256xf32>
    %40 = vector.extract_strided_slice %5 {offsets = [4, 0, 0], sizes = [1, 4, 4], strides = [1, 1, 1]} : vector<9x4x4xf32> to vector<1x4x4xf32>
    %41 = vector.shape_cast %40 : vector<1x4x4xf32> to vector<4x4xf32>
    %cst_30 = arith.constant dense<0.000000e+00> : vector<4x256xf32>
    %42 = tpu.matmul %41, %39, %cst_30 {dimension_numbers = #tpu.dot_dimension_numbers<[1], [0], [0], [1], [0, 0, 1, 1], [], []>} : vector<4x4xf32>, vector<4x256xf32>, vector<4x256xf32> -> vector<4x256xf32>
    %43 = arith.addf %38, %42 : vector<4x256xf32>
    %c0_31 = arith.constant 0 : index
    %c18 = arith.constant 18 : index
    %44 = vector.load %arg10[%c0_31, %c18] : memref<4x290xf32, #tpu.memory_space<vmem>>, vector<4x256xf32>
    %45 = vector.broadcast %10 : vector<1x256xf32> to vector<4x256xf32>
    %46 = arith.mulf %44, %45 : vector<4x256xf32>
    %47 = vector.extract_strided_slice %5 {offsets = [5, 0, 0], sizes = [1, 4, 4], strides = [1, 1, 1]} : vector<9x4x4xf32> to vector<1x4x4xf32>
    %48 = vector.shape_cast %47 : vector<1x4x4xf32> to vector<4x4xf32>
    %cst_32 = arith.constant dense<0.000000e+00> : vector<4x256xf32>
    %49 = tpu.matmul %48, %46, %cst_32 {dimension_numbers = #tpu.dot_dimension_numbers<[1], [0], [0], [1], [0, 0, 1, 1], [], []>} : vector<4x4xf32>, vector<4x256xf32>, vector<4x256xf32> -> vector<4x256xf32>
    %50 = arith.addf %43, %49 : vector<4x256xf32>
    %c0_33 = arith.constant 0 : index
    %c32 = arith.constant 32 : index
    %51 = vector.load %arg10[%c0_33, %c32] : memref<4x290xf32, #tpu.memory_space<vmem>>, vector<4x256xf32>
    %52 = vector.broadcast %8 : vector<1x256xf32> to vector<4x256xf32>
    %53 = arith.mulf %51, %52 : vector<4x256xf32>
    %54 = vector.extract_strided_slice %5 {offsets = [6, 0, 0], sizes = [1, 4, 4], strides = [1, 1, 1]} : vector<9x4x4xf32> to vector<1x4x4xf32>
    %55 = vector.shape_cast %54 : vector<1x4x4xf32> to vector<4x4xf32>
    %cst_34 = arith.constant dense<0.000000e+00> : vector<4x256xf32>
    %56 = tpu.matmul %55, %53, %cst_34 {dimension_numbers = #tpu.dot_dimension_numbers<[1], [0], [0], [1], [0, 0, 1, 1], [], []>} : vector<4x4xf32>, vector<4x256xf32>, vector<4x256xf32> -> vector<4x256xf32>
    %57 = arith.addf %50, %56 : vector<4x256xf32>
    %c0_35 = arith.constant 0 : index
    %c33 = arith.constant 33 : index
    %58 = vector.load %arg10[%c0_35, %c33] : memref<4x290xf32, #tpu.memory_space<vmem>>, vector<4x256xf32>
    %59 = vector.extract_strided_slice %5 {offsets = [7, 0, 0], sizes = [1, 4, 4], strides = [1, 1, 1]} : vector<9x4x4xf32> to vector<1x4x4xf32>
    %60 = vector.shape_cast %59 : vector<1x4x4xf32> to vector<4x4xf32>
    %cst_36 = arith.constant dense<0.000000e+00> : vector<4x256xf32>
    %61 = tpu.matmul %60, %58, %cst_36 {dimension_numbers = #tpu.dot_dimension_numbers<[1], [0], [0], [1], [0, 0, 1, 1], [], []>} : vector<4x4xf32>, vector<4x256xf32>, vector<4x256xf32> -> vector<4x256xf32>
    %62 = arith.addf %57, %61 : vector<4x256xf32>
    %c0_37 = arith.constant 0 : index
    %c34 = arith.constant 34 : index
    %63 = vector.load %arg10[%c0_37, %c34] : memref<4x290xf32, #tpu.memory_space<vmem>>, vector<4x256xf32>
    %64 = vector.broadcast %10 : vector<1x256xf32> to vector<4x256xf32>
    %65 = arith.mulf %63, %64 : vector<4x256xf32>
    %66 = vector.extract_strided_slice %5 {offsets = [8, 0, 0], sizes = [1, 4, 4], strides = [1, 1, 1]} : vector<9x4x4xf32> to vector<1x4x4xf32>
    %67 = vector.shape_cast %66 : vector<1x4x4xf32> to vector<4x4xf32>
    %cst_38 = arith.constant dense<0.000000e+00> : vector<4x256xf32>
    %68 = tpu.matmul %67, %65, %cst_38 {dimension_numbers = #tpu.dot_dimension_numbers<[1], [0], [0], [1], [0, 0, 1, 1], [], []>} : vector<4x4xf32>, vector<4x256xf32>, vector<4x256xf32> -> vector<4x256xf32>
    %69 = arith.addf %62, %68 : vector<4x256xf32>
    %c0_39 = arith.constant 0 : index
    %c0_40 = arith.constant 0 : index
    %70 = vector.load %arg4[%c0_39, %c0_40] : memref<4x1xf32, #tpu.memory_space<vmem>>, vector<4x1xf32>
    %71 = vector.broadcast %70 : vector<4x1xf32> to vector<4x256xf32>
    %72 = arith.mulf %69, %71 : vector<4x256xf32>
    %c0_41 = arith.constant 0 : index
    %c0_42 = arith.constant 0 : index
    %73 = vector.load %arg5[%c0_41, %c0_42] : memref<4x1xf32, #tpu.memory_space<vmem>>, vector<4x1xf32>
    %74 = vector.broadcast %73 : vector<4x1xf32> to vector<4x256xf32>
    %75 = arith.addf %72, %74 : vector<4x256xf32>
    %cst_43 = arith.constant 0.000000e+00 : f32
    %76 = vector.broadcast %cst_43 : f32 to vector<4x256xf32>
    %77 = arith.maximumf %75, %76 : vector<4x256xf32>
    %c0_44 = arith.constant 0 : index
    %c17_45 = arith.constant 17 : index
    %78 = vector.load %arg10[%c0_44, %c17_45] : memref<4x290xf32, #tpu.memory_space<vmem>>, vector<4x256xf32>
    tpu.vector_store %arg10[%c0_44, %c17_45], %77 {strides = array<i32>} : memref<4x290xf32, #tpu.memory_space<vmem>>, vector<4x256xf32>,
    %cst_46 = arith.constant 0.000000e+00 : f32
    %79 = vector.broadcast %cst_46 : f32 to vector<4x256xf32>
    %c0_47 = arith.constant 0 : index
    %c0_48 = arith.constant 0 : index
    %80 = vector.load %arg10[%c0_47, %c0_48] : memref<4x290xf32, #tpu.memory_space<vmem>>, vector<4x256xf32>
    %81 = vector.broadcast %8 : vector<1x256xf32> to vector<4x256xf32>
    %82 = arith.mulf %80, %81 : vector<4x256xf32>
    %83 = vector.extract_strided_slice %6 {offsets = [0, 0, 0], sizes = [1, 4, 4], strides = [1, 1, 1]} : vector<9x4x4xf32> to vector<1x4x4xf32>
    %84 = vector.shape_cast %83 : vector<1x4x4xf32> to vector<4x4xf32>
    %cst_49 = arith.constant dense<0.000000e+00> : vector<4x256xf32>
    %85 = tpu.matmul %84, %82, %cst_49 {dimension_numbers = #tpu.dot_dimension_numbers<[1], [0], [0], [1], [0, 0, 1, 1], [], []>} : vector<4x4xf32>, vector<4x256xf32>, vector<4x256xf32> -> vector<4x256xf32>
    %86 = arith.addf %79, %85 : vector<4x256xf32>
    %c0_50 = arith.constant 0 : index
    %c1_51 = arith.constant 1 : index
    %87 = vector.load %arg10[%c0_50, %c1_51] : memref<4x290xf32, #tpu.memory_space<vmem>>, vector<4x256xf32>
    %88 = vector.extract_strided_slice %6 {offsets = [1, 0, 0], sizes = [1, 4, 4], strides = [1, 1, 1]} : vector<9x4x4xf32> to vector<1x4x4xf32>
    %89 = vector.shape_cast %88 : vector<1x4x4xf32> to vector<4x4xf32>
    %cst_52 = arith.constant dense<0.000000e+00> : vector<4x256xf32>
    %90 = tpu.matmul %89, %87, %cst_52 {dimension_numbers = #tpu.dot_dimension_numbers<[1], [0], [0], [1], [0, 0, 1, 1], [], []>} : vector<4x4xf32>, vector<4x256xf32>, vector<4x256xf32> -> vector<4x256xf32>
    %91 = arith.addf %86, %90 : vector<4x256xf32>
    %c0_53 = arith.constant 0 : index
    %c2_54 = arith.constant 2 : index
    %92 = vector.load %arg10[%c0_53, %c2_54] : memref<4x290xf32, #tpu.memory_space<vmem>>, vector<4x256xf32>
    %93 = vector.broadcast %10 : vector<1x256xf32> to vector<4x256xf32>
    %94 = arith.mulf %92, %93 : vector<4x256xf32>
    %95 = vector.extract_strided_slice %6 {offsets = [2, 0, 0], sizes = [1, 4, 4], strides = [1, 1, 1]} : vector<9x4x4xf32> to vector<1x4x4xf32>
    %96 = vector.shape_cast %95 : vector<1x4x4xf32> to vector<4x4xf32>
    %cst_55 = arith.constant dense<0.000000e+00> : vector<4x256xf32>
    %97 = tpu.matmul %96, %94, %cst_55 {dimension_numbers = #tpu.dot_dimension_numbers<[1], [0], [0], [1], [0, 0, 1, 1], [], []>} : vector<4x4xf32>, vector<4x256xf32>, vector<4x256xf32> -> vector<4x256xf32>
    %98 = arith.addf %91, %97 : vector<4x256xf32>
    %c0_56 = arith.constant 0 : index
    %c16_57 = arith.constant 16 : index
    %99 = vector.load %arg10[%c0_56, %c16_57] : memref<4x290xf32, #tpu.memory_space<vmem>>, vector<4x256xf32>
    %100 = vector.broadcast %8 : vector<1x256xf32> to vector<4x256xf32>
    %101 = arith.mulf %99, %100 : vector<4x256xf32>
    %102 = vector.extract_strided_slice %6 {offsets = [3, 0, 0], sizes = [1, 4, 4], strides = [1, 1, 1]} : vector<9x4x4xf32> to vector<1x4x4xf32>
    %103 = vector.shape_cast %102 : vector<1x4x4xf32> to vector<4x4xf32>
    %cst_58 = arith.constant dense<0.000000e+00> : vector<4x256xf32>
    %104 = tpu.matmul %103, %101, %cst_58 {dimension_numbers = #tpu.dot_dimension_numbers<[1], [0], [0], [1], [0, 0, 1, 1], [], []>} : vector<4x4xf32>, vector<4x256xf32>, vector<4x256xf32> -> vector<4x256xf32>
    %105 = arith.addf %98, %104 : vector<4x256xf32>
    %c0_59 = arith.constant 0 : index
    %c17_60 = arith.constant 17 : index
    %106 = vector.load %arg10[%c0_59, %c17_60] : memref<4x290xf32, #tpu.memory_space<vmem>>, vector<4x256xf32>
    %107 = vector.extract_strided_slice %6 {offsets = [4, 0, 0], sizes = [1, 4, 4], strides = [1, 1, 1]} : vector<9x4x4xf32> to vector<1x4x4xf32>
    %108 = vector.shape_cast %107 : vector<1x4x4xf32> to vector<4x4xf32>
    %cst_61 = arith.constant dense<0.000000e+00> : vector<4x256xf32>
    %109 = tpu.matmul %108, %106, %cst_61 {dimension_numbers = #tpu.dot_dimension_numbers<[1], [0], [0], [1], [0, 0, 1, 1], [], []>} : vector<4x4xf32>, vector<4x256xf32>, vector<4x256xf32> -> vector<4x256xf32>
    %110 = arith.addf %105, %109 : vector<4x256xf32>
    %c0_62 = arith.constant 0 : index
    %c18_63 = arith.constant 18 : index
    %111 = vector.load %arg10[%c0_62, %c18_63] : memref<4x290xf32, #tpu.memory_space<vmem>>, vector<4x256xf32>
    %112 = vector.broadcast %10 : vector<1x256xf32> to vector<4x256xf32>
    %113 = arith.mulf %111, %112 : vector<4x256xf32>
    %114 = vector.extract_strided_slice %6 {offsets = [5, 0, 0], sizes = [1, 4, 4], strides = [1, 1, 1]} : vector<9x4x4xf32> to vector<1x4x4xf32>
    %115 = vector.shape_cast %114 : vector<1x4x4xf32> to vector<4x4xf32>
    %cst_64 = arith.constant dense<0.000000e+00> : vector<4x256xf32>
    %116 = tpu.matmul %115, %113, %cst_64 {dimension_numbers = #tpu.dot_dimension_numbers<[1], [0], [0], [1], [0, 0, 1, 1], [], []>} : vector<4x4xf32>, vector<4x256xf32>, vector<4x256xf32> -> vector<4x256xf32>
    %117 = arith.addf %110, %116 : vector<4x256xf32>
    %c0_65 = arith.constant 0 : index
    %c32_66 = arith.constant 32 : index
    %118 = vector.load %arg10[%c0_65, %c32_66] : memref<4x290xf32, #tpu.memory_space<vmem>>, vector<4x256xf32>
    %119 = vector.broadcast %8 : vector<1x256xf32> to vector<4x256xf32>
    %120 = arith.mulf %118, %119 : vector<4x256xf32>
    %121 = vector.extract_strided_slice %6 {offsets = [6, 0, 0], sizes = [1, 4, 4], strides = [1, 1, 1]} : vector<9x4x4xf32> to vector<1x4x4xf32>
    %122 = vector.shape_cast %121 : vector<1x4x4xf32> to vector<4x4xf32>
    %cst_67 = arith.constant dense<0.000000e+00> : vector<4x256xf32>
    %123 = tpu.matmul %122, %120, %cst_67 {dimension_numbers = #tpu.dot_dimension_numbers<[1], [0], [0], [1], [0, 0, 1, 1], [], []>} : vector<4x4xf32>, vector<4x256xf32>, vector<4x256xf32> -> vector<4x256xf32>
    %124 = arith.addf %117, %123 : vector<4x256xf32>
    %c0_68 = arith.constant 0 : index
    %c33_69 = arith.constant 33 : index
    %125 = vector.load %arg10[%c0_68, %c33_69] : memref<4x290xf32, #tpu.memory_space<vmem>>, vector<4x256xf32>
    %126 = vector.extract_strided_slice %6 {offsets = [7, 0, 0], sizes = [1, 4, 4], strides = [1, 1, 1]} : vector<9x4x4xf32> to vector<1x4x4xf32>
    %127 = vector.shape_cast %126 : vector<1x4x4xf32> to vector<4x4xf32>
    %cst_70 = arith.constant dense<0.000000e+00> : vector<4x256xf32>
    %128 = tpu.matmul %127, %125, %cst_70 {dimension_numbers = #tpu.dot_dimension_numbers<[1], [0], [0], [1], [0, 0, 1, 1], [], []>} : vector<4x4xf32>, vector<4x256xf32>, vector<4x256xf32> -> vector<4x256xf32>
    %129 = arith.addf %124, %128 : vector<4x256xf32>
    %c0_71 = arith.constant 0 : index
    %c34_72 = arith.constant 34 : index
    %130 = vector.load %arg10[%c0_71, %c34_72] : memref<4x290xf32, #tpu.memory_space<vmem>>, vector<4x256xf32>
    %131 = vector.broadcast %10 : vector<1x256xf32> to vector<4x256xf32>
    %132 = arith.mulf %130, %131 : vector<4x256xf32>
    %133 = vector.extract_strided_slice %6 {offsets = [8, 0, 0], sizes = [1, 4, 4], strides = [1, 1, 1]} : vector<9x4x4xf32> to vector<1x4x4xf32>
    %134 = vector.shape_cast %133 : vector<1x4x4xf32> to vector<4x4xf32>
    %cst_73 = arith.constant dense<0.000000e+00> : vector<4x256xf32>
    %135 = tpu.matmul %134, %132, %cst_73 {dimension_numbers = #tpu.dot_dimension_numbers<[1], [0], [0], [1], [0, 0, 1, 1], [], []>} : vector<4x4xf32>, vector<4x256xf32>, vector<4x256xf32> -> vector<4x256xf32>
    %136 = arith.addf %129, %135 : vector<4x256xf32>
    %c0_74 = arith.constant 0 : index
    %c0_75 = arith.constant 0 : index
    %137 = vector.load %arg7[%c0_74, %c0_75] : memref<4x1xf32, #tpu.memory_space<vmem>>, vector<4x1xf32>
    %138 = vector.broadcast %137 : vector<4x1xf32> to vector<4x256xf32>
    %139 = arith.mulf %136, %138 : vector<4x256xf32>
    %c0_76 = arith.constant 0 : index
    %c0_77 = arith.constant 0 : index
    %140 = vector.load %arg8[%c0_76, %c0_77] : memref<4x1xf32, #tpu.memory_space<vmem>>, vector<4x1xf32>
    %141 = vector.broadcast %140 : vector<4x1xf32> to vector<4x256xf32>
    %142 = arith.addf %139, %141 : vector<4x256xf32>
    %143 = arith.addf %142, %4 : vector<4x256xf32>
    %cst_78 = arith.constant 0.000000e+00 : f32
    %144 = vector.broadcast %cst_78 : f32 to vector<4x256xf32>
    %145 = arith.maximumf %143, %144 : vector<4x256xf32>
    %c0_79 = arith.constant 0 : index
    %c0_80 = arith.constant 0 : index
    %c0_81 = arith.constant 0 : index
    %146 = vector.load %arg9[%c0_79, %c0_80, %c0_81] : memref<1x4x256xf32, #tpu.memory_space<vmem>>, vector<1x4x256xf32>
    %147 = vector.shape_cast %146 : vector<1x4x256xf32> to vector<4x256xf32>
    %148 = vector.shape_cast %145 : vector<4x256xf32> to vector<1x4x256xf32>
    tpu.vector_store %arg9[%c0_79, %c0_80, %c0_81], %148 {strides = array<i32>} : memref<1x4x256xf32, #tpu.memory_space<vmem>>, vector<1x4x256xf32>,
    return
  }
  func.func @transform_0(%arg0: i32) -> (i32, i32, i32) {
    %c0_i32 = arith.constant 0 : i32
    %c0_i32_0 = arith.constant 0 : i32
    %c0_i32_1 = arith.constant 0 : i32
    %c0_i32_2 = arith.constant 0 : i32
    return %c0_i32, %c0_i32_0, %c0_i32_1 : i32, i32, i32
  }
  func.func @transform_1(%arg0: i32) -> (i32, i32, i32) {
    %c0_i32 = arith.constant 0 : i32
    %c0_i32_0 = arith.constant 0 : i32
    %c0_i32_1 = arith.constant 0 : i32
    return %arg0, %c0_i32, %c0_i32_0 : i32, i32, i32
  }
  func.func @transform_2(%arg0: i32) -> (i32, i32, i32) {
    %c0_i32 = arith.constant 0 : i32
    %c0_i32_0 = arith.constant 0 : i32
    %c0_i32_1 = arith.constant 0 : i32
    %c0_i32_2 = arith.constant 0 : i32
    return %c0_i32, %c0_i32_0, %c0_i32_1 : i32, i32, i32
  }
  func.func @transform_3(%arg0: i32) -> (i32, i32) {
    %c0_i32 = arith.constant 0 : i32
    %c0_i32_0 = arith.constant 0 : i32
    %c0_i32_1 = arith.constant 0 : i32
    return %c0_i32, %c0_i32_0 : i32, i32
  }
  func.func @transform_4(%arg0: i32) -> (i32, i32) {
    %c0_i32 = arith.constant 0 : i32
    %c0_i32_0 = arith.constant 0 : i32
    %c0_i32_1 = arith.constant 0 : i32
    return %c0_i32, %c0_i32_0 : i32, i32
  }
  func.func @transform_5(%arg0: i32) -> (i32, i32, i32) {
    %c0_i32 = arith.constant 0 : i32
    %c0_i32_0 = arith.constant 0 : i32
    %c0_i32_1 = arith.constant 0 : i32
    %c0_i32_2 = arith.constant 0 : i32
    return %c0_i32, %c0_i32_0, %c0_i32_1 : i32, i32, i32
  }
  func.func @transform_6(%arg0: i32) -> (i32, i32) {
    %c0_i32 = arith.constant 0 : i32
    %c0_i32_0 = arith.constant 0 : i32
    %c0_i32_1 = arith.constant 0 : i32
    return %c0_i32, %c0_i32_0 : i32, i32
  }
  func.func @transform_7(%arg0: i32) -> (i32, i32) {
    %c0_i32 = arith.constant 0 : i32
    %c0_i32_0 = arith.constant 0 : i32
    %c0_i32_1 = arith.constant 0 : i32
    return %c0_i32, %c0_i32_0 : i32, i32
  }
  func.func @transform_8(%arg0: i32) -> (i32, i32, i32) {
    %c0_i32 = arith.constant 0 : i32
    %c0_i32_0 = arith.constant 0 : i32
    %c0_i32_1 = arith.constant 0 : i32
    return %arg0, %c0_i32, %c0_i32_0 : i32, i32, i32
  }
}

</mosaic_0001>

<llo_original>
// kernel: tpu_custom_call.1
$region0: #{tpu_custom_call.1}
  #allocation0 [shape = 'u32[]', space=smem, size = 0x4, offset = 0x4, fixed_abs, tag = 'smem constant byte address 0x4 - core index']
  #allocation1 [shape = 'u32[72,128]{1,0:T(1,128)}', space=vmem, size = 0x9000, scoped, tag = 'internal scratch']
  #allocation2 [shape = 'f32[4,290]{1,0:T(4,128)}', space=vmem, size = 0x1800, scoped, tag = 'scratch operand']
  %s0 = inlined_call_operand.vmem [shape: f32[2,1,256], index: 0, kind: input, shape index: {}]
  %s1 = inlined_call_operand.vmem [shape: f32[2,4,256], index: 1, kind: input, shape index: {}]
  %s2 = inlined_call_operand.vmem [shape: f32[9,4,4], index: 2, kind: input, shape index: {}]
  %s3 = inlined_call_operand.vmem [shape: f32[4,1], index: 3, kind: input, shape index: {}]
  %s4 = inlined_call_operand.vmem [shape: f32[4,1], index: 4, kind: input, shape index: {}]
  %s5 = inlined_call_operand.vmem [shape: f32[9,4,4], index: 5, kind: input, shape index: {}]
  %s6 = inlined_call_operand.vmem [shape: f32[4,1], index: 6, kind: input, shape index: {}]
  %s7 = inlined_call_operand.vmem [shape: f32[4,1], index: 7, kind: input, shape index: {}]
  %s8 = inlined_call_operand.hbm [shape: f32[2,4,256], index: 8, kind: output, shape index: {}]
  %s9 = sld [smem:[#allocation0]]
  $region65: #{tpu_custom_call.1} parent=0
    _
  %s11 = ssub.s32 1, %s9
  %s12 = scalar_select 0, %s11, %s9
  $region1: #{tpu_custom_call.1} parent=0
    #allocation3 [shape = 'u8[8192]{0}', space=vmem, size = 0x2000, scoped, tag = 'output window, operand 0']
    #allocation4 [shape = 's32[2]{0}', space=sflag, size = 0x8, scoped, tag = 'scoped memory for tpu_custom_call.1']
    %13 = vsyncpa [#allocation4], 0
    %s14 = scalar_lea.sflag [#allocation4], 1
    %15 = vsyncpa %s14, 0
    loop: start=0, step=1, limit=4
    $region2: #{tpu_custom_call.1} parent=1 // loop_pre_header
      _
    $region3: #{tpu_custom_call.1} parent=1 // loop_header
      %s17 = sphi 0, %s21
      %p18 = scmp.ge.s32.totalorder %s17, 4
      %s25 = sphi 0, %s25
      %s27 = sphi 0, %s25
      %s28 = sphi 0, %s27
      %s42 = sphi 0, %s28
      %s48 = sphi 0, %s50
      %s51 = sphi 0, %s48
      %s52 = sphi 0, %s51
      %s68 = sphi 0, %s52
      %s72 = sphi 0, %s72
      %s74 = sphi 0, %s72
      %s75 = sphi 0, %s74
      %s89 = sphi 0, %s75
      %s93 = sphi 0, %s93
      %s95 = sphi 0, %s93
      %s96 = sphi 0, %s95
      %s110 = sphi 0, %s96
      %s114 = sphi 0, %s114
      %s116 = sphi 0, %s114
      %s117 = sphi 0, %s116
      %s131 = sphi 0, %s117
      %s135 = sphi 0, %s135
      %s137 = sphi 0, %s135
      %s138 = sphi 0, %s137
      %s152 = sphi 0, %s138
      %s156 = sphi 0, %s156
      %s158 = sphi 0, %s156
      %s159 = sphi 0, %s158
      %s173 = sphi 0, %s159
      %s177 = sphi 0, %s177
      %s179 = sphi 0, %s177
      %s180 = sphi 0, %s179
      %s194 = sphi 0, %s180
      %s200 = sphi 0, %s202
      %s203 = sphi 0, %s200
      %s204 = sphi 0, %s203
      %s220 = sphi 0, %s204
    $region4: #{tpu_custom_call.1} parent=1 // loop_header_branch
      %20 = sbr.rel (%p18) target = $region8
    $region5: #{tpu_custom_call.1} parent=1 // loop_body
      %s22 = ssub.s32 %s17, 1
      %s23 = ssub.s32 %s17, 2
      %s24 = sadd.s32 %s17, 1
      %s26 = sadd.s32 %s25, 1
      %p29 = scmp.eq.s32.totalorder %s17, 1
      %p30 = scmp.ne.s32.totalorder %s25, %s27
      %p31 = scmp.eq.s32.totalorder %s17, 0
      %p32 = por %p30, %p31
      %p33 = scmp.ne.s32.totalorder %s25, %s27
      %p34 = scmp.eq.s32.totalorder %s22, 1
      %p35 = por %p33, %p34
      %p36 = scmp.ne.s32.totalorder %s27, %s28
      %p37 = scmp.eq.s32.totalorder %s22, 0
      %p38 = por %p36, %p37
      %p39 = scmp.ne.s32.totalorder %s27, %s28
      %p40 = scmp.eq.s32.totalorder %s23, 1
      %p41 = por %p39, %p40
      %p43 = scmp.ne.s32.totalorder %s28, %s42
      %p44 = scmp.eq.s32.totalorder %s23, 0
      %p45 = por %p43, %p44
      %s46 = ssub.s32 %s17, %s24
      %p47 = scmp.eq.s32.totalorder %s46, 0
      %s49 = sadd.s32 %s48, 1
      %s50 = scalar_select %p47, %s48, %s49
      %p53 = pneg %p47
      %p54 = scmp.eq.s32.totalorder %s17, 1
      %p55 = por %p53, %p54
      %p56 = scmp.ne.s32.totalorder %s48, %s51
      %p57 = scmp.eq.s32.totalorder %s17, 0
      %p58 = por %p56, %p57
      %p59 = scmp.ne.s32.totalorder %s48, %s51
      %p60 = scmp.eq.s32.totalorder %s22, 1
      %p61 = por %p59, %p60
      %p62 = scmp.ne.s32.totalorder %s51, %s52
      %p63 = scmp.eq.s32.totalorder %s22, 0
      %p64 = por %p62, %p63
      %p65 = scmp.ne.s32.totalorder %s51, %s52
      %p66 = scmp.eq.s32.totalorder %s23, 1
      %p67 = por %p65, %p66
      %p69 = scmp.ne.s32.totalorder %s52, %s68
      %p70 = scmp.eq.s32.totalorder %s23, 0
      %p71 = por %p69, %p70
      %s73 = sadd.s32 %s72, 1
      %p76 = scmp.eq.s32.totalorder %s17, 1
      %p77 = scmp.ne.s32.totalorder %s72, %s74
      %p78 = scmp.eq.s32.totalorder %s17, 0
      %p79 = por %p77, %p78
      %p80 = scmp.ne.s32.totalorder %s72, %s74
      %p81 = scmp.eq.s32.totalorder %s22, 1
      %p82 = por %p80, %p81
      %p83 = scmp.ne.s32.totalorder %s74, %s75
      %p84 = scmp.eq.s32.totalorder %s22, 0
      %p85 = por %p83, %p84
      %p86 = scmp.ne.s32.totalorder %s74, %s75
      %p87 = scmp.eq.s32.totalorder %s23, 1
      %p88 = por %p86, %p87
      %p90 = scmp.ne.s32.totalorder %s75, %s89
      %p91 = scmp.eq.s32.totalorder %s23, 0
      %p92 = por %p90, %p91
      %s94 = sadd.s32 %s93, 1
      %p97 = scmp.eq.s32.totalorder %s17, 1
      %p98 = scmp.ne.s32.totalorder %s93, %s95
      %p99 = scmp.eq.s32.totalorder %s17, 0
      %p100 = por %p98, %p99
      %p101 = scmp.ne.s32.totalorder %s93, %s95
      %p102 = scmp.eq.s32.totalorder %s22, 1
      %p103 = por %p101, %p102
      %p104 = scmp.ne.s32.totalorder %s95, %s96
      %p105 = scmp.eq.s32.totalorder %s22, 0
      %p106 = por %p104, %p105
      %p107 = scmp.ne.s32.totalorder %s95, %s96
      %p108 = scmp.eq.s32.totalorder %s23, 1
      %p109 = por %p107, %p108
      %p111 = scmp.ne.s32.totalorder %s96, %s110
      %p112 = scmp.eq.s32.totalorder %s23, 0
      %p113 = por %p111, %p112
      %s115 = sadd.s32 %s114, 1
      %p118 = scmp.eq.s32.totalorder %s17, 1
      %p119 = scmp.ne.s32.totalorder %s114, %s116
      %p120 = scmp.eq.s32.totalorder %s17, 0
      %p121 = por %p119, %p120
      %p122 = scmp.ne.s32.totalorder %s114, %s116
      %p123 = scmp.eq.s32.totalorder %s22, 1
      %p124 = por %p122, %p123
      %p125 = scmp.ne.s32.totalorder %s116, %s117
      %p126 = scmp.eq.s32.totalorder %s22, 0
      %p127 = por %p125, %p126
      %p128 = scmp.ne.s32.totalorder %s116, %s117
      %p129 = scmp.eq.s32.totalorder %s23, 1
      %p130 = por %p128, %p129
      %p132 = scmp.ne.s32.totalorder %s117, %s131
      %p133 = scmp.eq.s32.totalorder %s23, 0
      %p134 = por %p132, %p133
      %s136 = sadd.s32 %s135, 1
      %p139 = scmp.eq.s32.totalorder %s17, 1
      %p140 = scmp.ne.s32.totalorder %s135, %s137
      %p141 = scmp.eq.s32.totalorder %s17, 0
      %p142 = por %p140, %p141
      %p143 = scmp.ne.s32.totalorder %s135, %s137
      %p144 = scmp.eq.s32.totalorder %s22, 1
      %p145 = por %p143, %p144
      %p146 = scmp.ne.s32.totalorder %s137, %s138
      %p147 = scmp.eq.s32.totalorder %s22, 0
      %p148 = por %p146, %p147
      %p149 = scmp.ne.s32.totalorder %s137, %s138
      %p150 = scmp.eq.s32.totalorder %s23, 1
      %p151 = por %p149, %p150
      %p153 = scmp.ne.s32.totalorder %s138, %s152
      %p154 = scmp.eq.s32.totalorder %s23, 0
      %p155 = por %p153, %p154
      %s157 = sadd.s32 %s156, 1
      %p160 = scmp.eq.s32.totalorder %s17, 1
      %p161 = scmp.ne.s32.totalorder %s156, %s158
      %p162 = scmp.eq.s32.totalorder %s17, 0
      %p163 = por %p161, %p162
      %p164 = scmp.ne.s32.totalorder %s156, %s158
      %p165 = scmp.eq.s32.totalorder %s22, 1
      %p166 = por %p164, %p165
      %p167 = scmp.ne.s32.totalorder %s158, %s159
      %p168 = scmp.eq.s32.totalorder %s22, 0
      %p169 = por %p167, %p168
      %p170 = scmp.ne.s32.totalorder %s158, %s159
      %p171 = scmp.eq.s32.totalorder %s23, 1
      %p172 = por %p170, %p171
      %p174 = scmp.ne.s32.totalorder %s159, %s173
      %p175 = scmp.eq.s32.totalorder %s23, 0
      %p176 = por %p174, %p175
      %s178 = sadd.s32 %s177, 1
      %p181 = scmp.eq.s32.totalorder %s17, 1
      %p182 = scmp.ne.s32.totalorder %s177, %s179
      %p183 = scmp.eq.s32.totalorder %s17, 0
      %p184 = por %p182, %p183
      %p185 = scmp.ne.s32.totalorder %s177, %s179
      %p186 = scmp.eq.s32.totalorder %s22, 1
      %p187 = por %p185, %p186
      %p188 = scmp.ne.s32.totalorder %s179, %s180
      %p189 = scmp.eq.s32.totalorder %s22, 0
      %p190 = por %p188, %p189
      %p191 = scmp.ne.s32.totalorder %s179, %s180
      %p192 = scmp.eq.s32.totalorder %s23, 1
      %p193 = por %p191, %p192
      %p195 = scmp.ne.s32.totalorder %s180, %s194
      %p196 = scmp.eq.s32.totalorder %s23, 0
      %p197 = por %p195, %p196
      %s198 = ssub.s32 %s17, %s24
      %p199 = scmp.eq.s32.totalorder %s198, 0
      %s201 = sadd.s32 %s200, 1
      %s202 = scalar_select %p199, %s200, %s201
      %p205 = pneg %p199
      %p206 = scmp.eq.s32.totalorder %s17, 1
      %p207 = por %p205, %p206
      %p208 = scmp.ne.s32.totalorder %s200, %s203
      %p209 = scmp.eq.s32.totalorder %s17, 0
      %p210 = por %p208, %p209
      %p211 = scmp.ne.s32.totalorder %s200, %s203
      %p212 = scmp.eq.s32.totalorder %s22, 1
      %p213 = por %p211, %p212
      %p214 = scmp.ne.s32.totalorder %s203, %s204
      %p215 = scmp.eq.s32.totalorder %s22, 0
      %p216 = por %p214, %p215
      %p217 = scmp.ne.s32.totalorder %s203, %s204
      %p218 = scmp.eq.s32.totalorder %s23, 1
      %p219 = por %p217, %p218
      %p221 = scmp.ne.s32.totalorder %s204, %s220
      %p222 = scmp.eq.s32.totalorder %s23, 0
      %p223 = por %p221, %p222
      %p224 = scmp.le.s32.totalorder 1, %s17
      %p225 = scmp.lt.s32.totalorder %s17, 3
      %p226 = pnand %p224, %p225
      %p227 = pneg %p226
      // Predicated region
      $region9: #{tpu_custom_call.1} parent=5 // pred_check
        _
      $region10: #{tpu_custom_call.1} parent=5 // pred_check_branch
        %229 = sbr.rel (%p226) target = $region12
      $region11: #{tpu_custom_call.1} parent=5 // pred_region
        %s230 = ssub.s32 %s17, 1
        // Predicated region
        $region13: #{tpu_custom_call.1} parent=11 // pred_check
          %p231 = pneg %p38
        $region14: #{tpu_custom_call.1} parent=11 // pred_check_branch
          %233 = sbr.rel (%p231) target = $region16
        $region15: #{tpu_custom_call.1} parent=11 // pred_region
          _
        $region16: #{tpu_custom_call.1} parent=11 // pred_fallthru
          _
        // Predicated region
        $region17: #{tpu_custom_call.1} parent=11 // pred_check
          %p234 = pneg %p85
        $region18: #{tpu_custom_call.1} parent=11 // pred_check_branch
          %236 = sbr.rel (%p234) target = $region20
        $region19: #{tpu_custom_call.1} parent=11 // pred_region
          _
        $region20: #{tpu_custom_call.1} parent=11 // pred_fallthru
          _
        // Predicated region
        $region21: #{tpu_custom_call.1} parent=11 // pred_check
          %p237 = pneg %p106
        $region22: #{tpu_custom_call.1} parent=11 // pred_check_branch
          %239 = sbr.rel (%p237) target = $region24
        $region23: #{tpu_custom_call.1} parent=11 // pred_region
          _
        $region24: #{tpu_custom_call.1} parent=11 // pred_fallthru
          _
        // Predicated region
        $region25: #{tpu_custom_call.1} parent=11 // pred_check
          %p240 = pneg %p127
        $region26: #{tpu_custom_call.1} parent=11 // pred_check_branch
          %242 = sbr.rel (%p240) target = $region28
        $region27: #{tpu_custom_call.1} parent=11 // pred_region
          _
        $region28: #{tpu_custom_call.1} parent=11 // pred_fallthru
          _
        // Predicated region
        $region29: #{tpu_custom_call.1} parent=11 // pred_check
          %p243 = pneg %p148
        $region30: #{tpu_custom_call.1} parent=11 // pred_check_branch
          %245 = sbr.rel (%p243) target = $region32
        $region31: #{tpu_custom_call.1} parent=11 // pred_region
          _
        $region32: #{tpu_custom_call.1} parent=11 // pred_fallthru
          _
        // Predicated region
        $region33: #{tpu_custom_call.1} parent=11 // pred_check
          %p246 = pneg %p169
        $region34: #{tpu_custom_call.1} parent=11 // pred_check_branch
          %248 = sbr.rel (%p246) target = $region36
        $region35: #{tpu_custom_call.1} parent=11 // pred_region
          _
        $region36: #{tpu_custom_call.1} parent=11 // pred_fallthru
          _
        // Predicated region
        $region37: #{tpu_custom_call.1} parent=11 // pred_check
          %p249 = pneg %p190
        $region38: #{tpu_custom_call.1} parent=11 // pred_check_branch
          %251 = sbr.rel (%p249) target = $region40
        $region39: #{tpu_custom_call.1} parent=11 // pred_region
          _
        $region40: #{tpu_custom_call.1} parent=11 // pred_fallthru
          _
      $region12: #{tpu_custom_call.1} parent=5 // pred_fallthru
        _
      %p252 = scmp.lt.s32.totalorder %s17, 2
      // Predicated region
      $region41: #{tpu_custom_call.1} parent=5 // pred_check
        %p253 = pneg %p252
      $region42: #{tpu_custom_call.1} parent=5 // pred_check_branch
        %255 = sbr.rel (%p253) target = $region44
      $region43: #{tpu_custom_call.1} parent=5 // pred_region
        // Predicated region
        $region45: #{tpu_custom_call.1} parent=43 // pred_check
          %p256 = pneg %p58
        $region46: #{tpu_custom_call.1} parent=43 // pred_check_branch
          %258 = sbr.rel (%p256) target = $region48
        $region47: #{tpu_custom_call.1} parent=43 // pred_region
          %p259 = scmp.lt.s32.totalorder %s17, 1
          %s260 = scalar_select %p259, %s17, 1
          %s261 = smul.addr %s260, 2
          %s262 = smul.addr %s261, 4
          %s263 = scalar_lea.vmem %s1, %s262
        $region48: #{tpu_custom_call.1} parent=43 // pred_fallthru
          _
      $region44: #{tpu_custom_call.1} parent=5 // pred_fallthru
        _
      %p264 = scmp.le.s32.totalorder 1, %s17
      %p265 = scmp.lt.s32.totalorder %s17, 3
      %p266 = pnand %p264, %p265
      %p267 = pneg %p266
      // Predicated region
      $region49: #{tpu_custom_call.1} parent=5 // pred_check
        _
      $region50: #{tpu_custom_call.1} parent=5 // pred_check_branch
        %269 = sbr.rel (%p266) target = $region52
      $region51: #{tpu_custom_call.1} parent=5 // pred_region
        %s270 = ssub.s32 %s17, 1
        %p271 = pneg %p38
        %p272 = pneg %p35
        %p273 = scmp.lt.s32.totalorder %s22, 1
        %s274 = scalar_select %p273, %s22, 1
        %s275 = smul.addr %s274, 2
        %s276 = smul.addr %s275, 4
        %s277 = scalar_lea.vmem %s1, %s276
        %p278 = pneg %p64
        %p279 = pneg %p61
        %p280 = pneg %p85
        %p281 = pneg %p82
        %p282 = pneg %p106
        %p283 = pneg %p103
        %p284 = pneg %p127
        %p285 = pneg %p124
        %p286 = pneg %p148
        %p287 = pneg %p145
        %p288 = pneg %p169
        %p289 = pneg %p166
        %p290 = pneg %p190
        %p291 = pneg %p187
        %p292 = pneg %p216
        %p293 = pneg %p213
        %s294 = sand.u32 %s203, 1
        %s295 = scalar_lea.sflag [#allocation4], %s294
        %s296 = sand.u32 %s203, 1
        %s297 = smul.addr %s296, 8
        %s298 = scalar_lea.vmem [#allocation3], %s297
        %p299 = scmp.lt.s32.totalorder %s22, 1
        %s300 = scalar_select %p299, %s22, 1
        %s301 = smul.addr %s300, 2
        %s302 = smul.addr %s301, 4
        %s303 = scalar_lea.vmem %s1, %s302
        %vm304 = vcmask 134144
        %305 = vst.msk [vmem:[#allocation2] sm:$0xf] %vm304, 0.0
        %vm306 = vcmask 273544
        %307 = vst.msk [vmem:[#allocation2 + $0x8] sm:$0xf] %vm306, 0.0
        %v308 = vld [vmem:[%s303] sm:$0xff]
        %v309 = vld [vmem:[%s2] sm:$0xf]
        %v310 = vld [vmem:[%s2 + $0x4] sm:$0xf]
        %v311 = vld [vmem:[%s2 + $0x8] sm:$0xf]
        %v312 = vld [vmem:[%s2 + $0xc] sm:$0xf]
        %v313 = vld [vmem:[%s2 + $0x10] sm:$0xf]
        %v314 = vld [vmem:[%s2 + $0x14] sm:$0xf]
        %v315 = vld [vmem:[%s2 + $0x18] sm:$0xf]
        %v316 = vld [vmem:[%s2 + $0x1c] sm:$0xf]
        %v317 = vld [vmem:[%s2 + $0x20] sm:$0xf]
        %v318 = vld [vmem:[%s5] sm:$0xf]
        %v319 = vld [vmem:[%s5 + $0x4] sm:$0xf]
        %v320 = vld [vmem:[%s5 + $0x8] sm:$0xf]
        %v321 = vld [vmem:[%s5 + $0xc] sm:$0xf]
        %v322 = vld [vmem:[%s5 + $0x10] sm:$0xf]
        %v323 = vld [vmem:[%s5 + $0x14] sm:$0xf]
        %v324 = vld [vmem:[%s5 + $0x18] sm:$0xf]
        %v325 = vld [vmem:[%s5 + $0x1c] sm:$0xf]
        %v326 = vld [vmem:[%s5 + $0x20] sm:$0xf]
        %v327 = vld [vmem:[%s0] sm:$0x3]
        %s328 = scalar_lea.vmem %s0, 2
        %v329 = vld [vmem:[%s328] sm:$0x3]
        %331 = vrot.lane.b32.xlu0 %v308, 17
        %v332 = vpop.permute.xlu0 %331
        %v333 = vrot.slane %v332, 4
        %vm334 = vcmask 138240
        %v335 = vsel %vm334, %v333, %v332
        %vm338 = vcmask 1043592
        %vm339 = vcmask 1047556
        %vm340 = vmor %vm339, %vm338
        %341 = vst.msk [vmem:[#allocation2] sm:$0xff] %vm340, %v335
        %342 = vst.msk [vmem:[#allocation2 + $0x8] sm:$0xf] %vm304, %v333
        %v343 = vld [vmem:[#allocation2] sm:$0xff]
        %v345 = vperm.slane %v327, 0
        %v346 = vperm.slane %v327, 1
        %v347 = vrot.slane %v346, 4
        %vm348 = vcmask 1043456
        %v349 = vsel %vm348, %v345, %v347
        %v351 = vmul.f32 %v343, %v349
        %v352 = vld [vmem:[#allocation2 + $0x8] sm:$0xf]
        %355 = vst [vmem:[#allocation1] ss:$2 sm:$0xff] %v343
        %s356 = scalar_lea.vmem [#allocation1], 16
        %357 = vst [vmem:[%s356] ss:$2 sm:$0xff] %v352
        %v358 = vld.sshfl [vmem:[#allocation1] sm:$0xff pattern:$0x75316420]
        %v359 = vld.sshfl [vmem:[#allocation1 + $0x8] sm:$0xff pattern:$0x75316420]
        %v360 = vld.sshfl [vmem:[#allocation1 + $0x10] sm:$0xff pattern:$0x75316420]
        %361 = vrot.lane.b32.xlu0 %v358, 127
        %v362 = vpop.permute.xlu0 %361
        %363 = vrot.lane.b32.xlu0 %v359, 127
        %v364 = vpop.permute.xlu0 %363
        %365 = vrot.lane.b32.xlu0 %v360, 127
        %v366 = vpop.permute.xlu0 %365
        %vm367 = vcmask 1039360
        %v368 = vsel %vm367, %v362, %v364
        %v369 = vsel %vm367, %v364, %v366
        %vm370 = vcmask 31744
        %v372 = vsel %vm370, %v310, 0
        %v374 = vsel %vm348, %v368, 0
        %v376 = vsel %vm348, %v369, 0
        %378 = vmatpush.msra.mxu0 0.0
        %379 = vmatpush.msra.mxu0 0.0
        %380 = vmatpush.msra.mxu0 0.0
        %381 = vmatpush.msra.mxu0 0.0
        %382 = vmatpush.msra.mxu0 0.0
        %383 = vmatpush.msra.mxu0 0.0
        %384 = vmatpush.msra.mxu0 0.0
        %385 = vmatpush.msra.mxu0 0.0
        %386 = vmatpush.msra.mxu0 0.0
        %387 = vmatpush.msra.mxu0 0.0
        %388 = vmatpush.msra.mxu0 0.0
        %389 = vmatpush.msra.mxu0 0.0
        %390 = vmatpush.msra.mxu0 0.0
        %391 = vmatpush.msra.mxu0 0.0
        %392 = vmatpush.msra.mxu0 0.0
        %393 = vmatpush.msra.mxu0 %v374
        %394 = vmatmul.f32.gmra.mxu0 %v372
        %v395 = vpop.f32.mrf.mxu0
        %v396 = vadd.f32 0.0, %v395
        %397 = vdwg.mxu0
        %398 = vmatpush.msra.mxu0 0.0
        %399 = vmatpush.msra.mxu0 0.0
        %400 = vmatpush.msra.mxu0 0.0
        %401 = vmatpush.msra.mxu0 0.0
        %402 = vmatpush.msra.mxu0 0.0
        %403 = vmatpush.msra.mxu0 0.0
        %404 = vmatpush.msra.mxu0 0.0
        %405 = vmatpush.msra.mxu0 0.0
        %406 = vmatpush.msra.mxu0 0.0
        %407 = vmatpush.msra.mxu0 0.0
        %408 = vmatpush.msra.mxu0 0.0
        %409 = vmatpush.msra.mxu0 0.0
        %410 = vmatpush.msra.mxu0 0.0
        %411 = vmatpush.msra.mxu0 0.0
        %412 = vmatpush.msra.mxu0 0.0
        %413 = vmatpush.msra.mxu0 %v376
        %414 = vmatmul.f32.gmra.mxu0 %v372
        %v415 = vpop.f32.mrf.mxu0
        %v416 = vadd.f32 0.0, %v415
        %417 = vdwg.mxu0
        %419 = vst [vmem:[#allocation1] ss:$2 sm:$0xff] %v351
        %v420 = vld.sshfl [vmem:[#allocation1] sm:$0xff pattern:$0x75316420]
        %v421 = vld.sshfl [vmem:[#allocation1 + $0x8] sm:$0xff pattern:$0x75316420]
        %v423 = vsel %vm370, %v309, 0
        %v425 = vsel %vm348, %v420, 0
        %v427 = vsel %vm348, %v421, 0
        %429 = vmatpush.msra.mxu0 0.0
        %430 = vmatpush.msra.mxu0 0.0
        %431 = vmatpush.msra.mxu0 0.0
        %432 = vmatpush.msra.mxu0 0.0
        %433 = vmatpush.msra.mxu0 0.0
        %434 = vmatpush.msra.mxu0 0.0
        %435 = vmatpush.msra.mxu0 0.0
        %436 = vmatpush.msra.mxu0 0.0
        %437 = vmatpush.msra.mxu0 0.0
        %438 = vmatpush.msra.mxu0 0.0
        %439 = vmatpush.msra.mxu0 0.0
        %440 = vmatpush.msra.mxu0 0.0
        %441 = vmatpush.msra.mxu0 0.0
        %442 = vmatpush.msra.mxu0 0.0
        %443 = vmatpush.msra.mxu0 0.0
        %444 = vmatpush.msra.mxu0 %v425
        %445 = vmatmul.f32.gmra.mxu0 %v423
        %v446 = vpop.f32.mrf.mxu0
        %v447 = vadd.f32 %v396, %v446
        %448 = vdwg.mxu0
        %449 = vmatpush.msra.mxu0 0.0
        %450 = vmatpush.msra.mxu0 0.0
        %451 = vmatpush.msra.mxu0 0.0
        %452 = vmatpush.msra.mxu0 0.0
        %453 = vmatpush.msra.mxu0 0.0
        %454 = vmatpush.msra.mxu0 0.0
        %455 = vmatpush.msra.mxu0 0.0
        %456 = vmatpush.msra.mxu0 0.0
        %457 = vmatpush.msra.mxu0 0.0
        %458 = vmatpush.msra.mxu0 0.0
        %459 = vmatpush.msra.mxu0 0.0
        %460 = vmatpush.msra.mxu0 0.0
        %461 = vmatpush.msra.mxu0 0.0
        %462 = vmatpush.msra.mxu0 0.0
        %463 = vmatpush.msra.mxu0 0.0
        %464 = vmatpush.msra.mxu0 %v427
        %465 = vmatmul.f32.gmra.mxu0 %v423
        %v466 = vpop.f32.mrf.mxu0
        %v467 = vadd.f32 %v416, %v466
        %468 = vdwg.mxu0
        %v469 = vld [vmem:[#allocation2] sm:$0xff]
        %v470 = vld [vmem:[#allocation2 + $0x8] sm:$0xf]
        %v472 = vperm.slane %v329, 0
        %v473 = vperm.slane %v329, 1
        %v474 = vrot.slane %v473, 4
        %v475 = vsel %vm348, %v472, %v474
        %476 = vrot.lane.b32.xlu0 %v475, 2
        %v477 = vpop.permute.xlu0 %476
        %v478 = vrot.slane %v477, 4
        %vm479 = vcmask 15360
        %v480 = vsel %vm479, %v478, %v477
        %v483 = vmul.f32 %v469, %v480
        %v484 = vmul.f32 %v470, %v478
        %487 = vst [vmem:[#allocation1] ss:$2 sm:$0xff] %v483
        %s488 = scalar_lea.vmem [#allocation1], 16
        %489 = vst [vmem:[%s488] ss:$2 sm:$0xff] %v484
        %v490 = vld.sshfl [vmem:[#allocation1] sm:$0xff pattern:$0x75316420]
        %v491 = vld.sshfl [vmem:[#allocation1 + $0x8] sm:$0xff pattern:$0x75316420]
        %v492 = vld.sshfl [vmem:[#allocation1 + $0x10] sm:$0xff pattern:$0x75316420]
        %493 = vrot.lane.b32.xlu0 %v490, 126
        %v494 = vpop.permute.xlu0 %493
        %495 = vrot.lane.b32.xlu0 %v491, 126
        %v496 = vpop.permute.xlu0 %495
        %497 = vrot.lane.b32.xlu0 %v492, 126
        %v498 = vpop.permute.xlu0 %497
        %vm499 = vcmask 1031168
        %v500 = vsel %vm499, %v494, %v496
        %v501 = vsel %vm499, %v496, %v498
        %v503 = vsel %vm370, %v311, 0
        %v505 = vsel %vm348, %v500, 0
        %v507 = vsel %vm348, %v501, 0
        %509 = vmatpush.msra.mxu0 0.0
        %510 = vmatpush.msra.mxu0 0.0
        %511 = vmatpush.msra.mxu0 0.0
        %512 = vmatpush.msra.mxu0 0.0
        %513 = vmatpush.msra.mxu0 0.0
        %514 = vmatpush.msra.mxu0 0.0
        %515 = vmatpush.msra.mxu0 0.0
        %516 = vmatpush.msra.mxu0 0.0
        %517 = vmatpush.msra.mxu0 0.0
        %518 = vmatpush.msra.mxu0 0.0
        %519 = vmatpush.msra.mxu0 0.0
        %520 = vmatpush.msra.mxu0 0.0
        %521 = vmatpush.msra.mxu0 0.0
        %522 = vmatpush.msra.mxu0 0.0
        %523 = vmatpush.msra.mxu0 0.0
        %524 = vmatpush.msra.mxu0 %v505
        %525 = vmatmul.f32.gmra.mxu0 %v503
        %v526 = vpop.f32.mrf.mxu0
        %v527 = vadd.f32 0.0, %v526
        %528 = vdwg.mxu0
        %529 = vmatpush.msra.mxu0 0.0
        %530 = vmatpush.msra.mxu0 0.0
        %531 = vmatpush.msra.mxu0 0.0
        %532 = vmatpush.msra.mxu0 0.0
        %533 = vmatpush.msra.mxu0 0.0
        %534 = vmatpush.msra.mxu0 0.0
        %535 = vmatpush.msra.mxu0 0.0
        %536 = vmatpush.msra.mxu0 0.0
        %537 = vmatpush.msra.mxu0 0.0
        %538 = vmatpush.msra.mxu0 0.0
        %539 = vmatpush.msra.mxu0 0.0
        %540 = vmatpush.msra.mxu0 0.0
        %541 = vmatpush.msra.mxu0 0.0
        %542 = vmatpush.msra.mxu0 0.0
        %543 = vmatpush.msra.mxu0 0.0
        %544 = vmatpush.msra.mxu0 %v507
        %545 = vmatmul.f32.gmra.mxu0 %v503
        %v546 = vpop.f32.mrf.mxu0
        %v547 = vadd.f32 0.0, %v546
        %548 = vdwg.mxu0
        %v549 = vadd.f32 %v447, %v527
        %v550 = vadd.f32 %v467, %v547
        %v551 = vld [vmem:[#allocation2] sm:$0xff]
        %v552 = vld [vmem:[#allocation2 + $0x8] sm:$0xf]
        %553 = vrot.lane.b32.xlu0 %v349, 16
        %v554 = vpop.permute.xlu0 %553
        %v555 = vrot.slane %v554, 4
        %vm556 = vcmask 130048
        %v557 = vsel %vm556, %v555, %v554
        %v560 = vmul.f32 %v551, %v557
        %v561 = vmul.f32 %v552, %v555
        %564 = vst [vmem:[#allocation1] ss:$2 sm:$0xff] %v560
        %s565 = scalar_lea.vmem [#allocation1], 16
        %566 = vst [vmem:[%s565] ss:$2 sm:$0xff] %v561
        %v567 = vld.sshfl [vmem:[#allocation1] sm:$0xff pattern:$0x75316420]
        %v568 = vld.sshfl [vmem:[#allocation1 + $0x8] sm:$0xff pattern:$0x75316420]
        %v569 = vld.sshfl [vmem:[#allocation1 + $0x10] sm:$0xff pattern:$0x75316420]
        %570 = vrot.lane.b32.xlu0 %v567, 112
        %v571 = vpop.permute.xlu0 %570
        %572 = vrot.lane.b32.xlu0 %v568, 112
        %v573 = vpop.permute.xlu0 %572
        %574 = vrot.lane.b32.xlu0 %v569, 112
        %v575 = vpop.permute.xlu0 %574
        %vm576 = vcmask 916480
        %v577 = vsel %vm576, %v571, %v573
        %v578 = vsel %vm576, %v573, %v575
        %v580 = vsel %vm370, %v312, 0
        %v582 = vsel %vm348, %v577, 0
        %v584 = vsel %vm348, %v578, 0
        %586 = vmatpush.msra.mxu0 0.0
        %587 = vmatpush.msra.mxu0 0.0
        %588 = vmatpush.msra.mxu0 0.0
        %589 = vmatpush.msra.mxu0 0.0
        %590 = vmatpush.msra.mxu0 0.0
        %591 = vmatpush.msra.mxu0 0.0
        %592 = vmatpush.msra.mxu0 0.0
        %593 = vmatpush.msra.mxu0 0.0
        %594 = vmatpush.msra.mxu0 0.0
        %595 = vmatpush.msra.mxu0 0.0
        %596 = vmatpush.msra.mxu0 0.0
        %597 = vmatpush.msra.mxu0 0.0
        %598 = vmatpush.msra.mxu0 0.0
        %599 = vmatpush.msra.mxu0 0.0
        %600 = vmatpush.msra.mxu0 0.0
        %601 = vmatpush.msra.mxu0 %v582
        %602 = vmatmul.f32.gmra.mxu0 %v580
        %v603 = vpop.f32.mrf.mxu0
        %v604 = vadd.f32 0.0, %v603
        %605 = vdwg.mxu0
        %606 = vmatpush.msra.mxu0 0.0
        %607 = vmatpush.msra.mxu0 0.0
        %608 = vmatpush.msra.mxu0 0.0
        %609 = vmatpush.msra.mxu0 0.0
        %610 = vmatpush.msra.mxu0 0.0
        %611 = vmatpush.msra.mxu0 0.0
        %612 = vmatpush.msra.mxu0 0.0
        %613 = vmatpush.msra.mxu0 0.0
        %614 = vmatpush.msra.mxu0 0.0
        %615 = vmatpush.msra.mxu0 0.0
        %616 = vmatpush.msra.mxu0 0.0
        %617 = vmatpush.msra.mxu0 0.0
        %618 = vmatpush.msra.mxu0 0.0
        %619 = vmatpush.msra.mxu0 0.0
        %620 = vmatpush.msra.mxu0 0.0
        %621 = vmatpush.msra.mxu0 %v584
        %622 = vmatmul.f32.gmra.mxu0 %v580
        %v623 = vpop.f32.mrf.mxu0
        %v624 = vadd.f32 0.0, %v623
        %625 = vdwg.mxu0
        %v626 = vadd.f32 %v549, %v604
        %v627 = vadd.f32 %v550, %v624
        %v628 = vld [vmem:[#allocation2] sm:$0xff]
        %v629 = vld [vmem:[#allocation2 + $0x8] sm:$0xf]
        %632 = vst [vmem:[#allocation1] ss:$2 sm:$0xff] %v628
        %s633 = scalar_lea.vmem [#allocation1], 16
        %634 = vst [vmem:[%s633] ss:$2 sm:$0xff] %v629
        %v635 = vld.sshfl [vmem:[#allocation1] sm:$0xff pattern:$0x75316420]
        %v636 = vld.sshfl [vmem:[#allocation1 + $0x8] sm:$0xff pattern:$0x75316420]
        %v637 = vld.sshfl [vmem:[#allocation1 + $0x10] sm:$0xff pattern:$0x75316420]
        %638 = vrot.lane.b32.xlu0 %v635, 111
        %v639 = vpop.permute.xlu0 %638
        %640 = vrot.lane.b32.xlu0 %v636, 111
        %v641 = vpop.permute.xlu0 %640
        %642 = vrot.lane.b32.xlu0 %v637, 111
        %v643 = vpop.permute.xlu0 %642
        %vm644 = vcmask 908288
        %v645 = vsel %vm644, %v639, %v641
        %v646 = vsel %vm644, %v641, %v643
        %v648 = vsel %vm370, %v313, 0
        %v650 = vsel %vm348, %v645, 0
        %v652 = vsel %vm348, %v646, 0
        %654 = vmatpush.msra.mxu0 0.0
        %655 = vmatpush.msra.mxu0 0.0
        %656 = vmatpush.msra.mxu0 0.0
        %657 = vmatpush.msra.mxu0 0.0
        %658 = vmatpush.msra.mxu0 0.0
        %659 = vmatpush.msra.mxu0 0.0
        %660 = vmatpush.msra.mxu0 0.0
        %661 = vmatpush.msra.mxu0 0.0
        %662 = vmatpush.msra.mxu0 0.0
        %663 = vmatpush.msra.mxu0 0.0
        %664 = vmatpush.msra.mxu0 0.0
        %665 = vmatpush.msra.mxu0 0.0
        %666 = vmatpush.msra.mxu0 0.0
        %667 = vmatpush.msra.mxu0 0.0
        %668 = vmatpush.msra.mxu0 0.0
        %669 = vmatpush.msra.mxu0 %v650
        %670 = vmatmul.f32.gmra.mxu0 %v648
        %v671 = vpop.f32.mrf.mxu0
        %v672 = vadd.f32 0.0, %v671
        %673 = vdwg.mxu0
        %674 = vmatpush.msra.mxu0 0.0
        %675 = vmatpush.msra.mxu0 0.0
        %676 = vmatpush.msra.mxu0 0.0
        %677 = vmatpush.msra.mxu0 0.0
        %678 = vmatpush.msra.mxu0 0.0
        %679 = vmatpush.msra.mxu0 0.0
        %680 = vmatpush.msra.mxu0 0.0
        %681 = vmatpush.msra.mxu0 0.0
        %682 = vmatpush.msra.mxu0 0.0
        %683 = vmatpush.msra.mxu0 0.0
        %684 = vmatpush.msra.mxu0 0.0
        %685 = vmatpush.msra.mxu0 0.0
        %686 = vmatpush.msra.mxu0 0.0
        %687 = vmatpush.msra.mxu0 0.0
        %688 = vmatpush.msra.mxu0 0.0
        %689 = vmatpush.msra.mxu0 %v652
        %690 = vmatmul.f32.gmra.mxu0 %v648
        %v691 = vpop.f32.mrf.mxu0
        %v692 = vadd.f32 0.0, %v691
        %693 = vdwg.mxu0
        %v694 = vadd.f32 %v626, %v672
        %v695 = vadd.f32 %v627, %v692
        %v696 = vld [vmem:[#allocation2] sm:$0xff]
        %v697 = vld [vmem:[#allocation2 + $0x8] sm:$0xf]
        %698 = vrot.lane.b32.xlu0 %v475, 18
        %v699 = vpop.permute.xlu0 %698
        %v700 = vrot.slane %v699, 4
        %vm701 = vcmask 146432
        %v702 = vsel %vm701, %v700, %v699
        %v705 = vmul.f32 %v696, %v702
        %v706 = vmul.f32 %v697, %v700
        %709 = vst [vmem:[#allocation1] ss:$2 sm:$0xff] %v705
        %s710 = scalar_lea.vmem [#allocation1], 16
        %711 = vst [vmem:[%s710] ss:$2 sm:$0xff] %v706
        %v712 = vld.sshfl [vmem:[#allocation1] sm:$0xff pattern:$0x75316420]
        %v713 = vld.sshfl [vmem:[#allocation1 + $0x8] sm:$0xff pattern:$0x75316420]
        %v714 = vld.sshfl [vmem:[#allocation1 + $0x10] sm:$0xff pattern:$0x75316420]
        %715 = vrot.lane.b32.xlu0 %v712, 110
        %v716 = vpop.permute.xlu0 %715
        %717 = vrot.lane.b32.xlu0 %v713, 110
        %v718 = vpop.permute.xlu0 %717
        %719 = vrot.lane.b32.xlu0 %v714, 110
        %v720 = vpop.permute.xlu0 %719
        %vm721 = vcmask 900096
        %v722 = vsel %vm721, %v716, %v718
        %v723 = vsel %vm721, %v718, %v720
        %v725 = vsel %vm370, %v314, 0
        %v727 = vsel %vm348, %v722, 0
        %v729 = vsel %vm348, %v723, 0
        %731 = vmatpush.msra.mxu0 0.0
        %732 = vmatpush.msra.mxu0 0.0
        %733 = vmatpush.msra.mxu0 0.0
        %734 = vmatpush.msra.mxu0 0.0
        %735 = vmatpush.msra.mxu0 0.0
        %736 = vmatpush.msra.mxu0 0.0
        %737 = vmatpush.msra.mxu0 0.0
        %738 = vmatpush.msra.mxu0 0.0
        %739 = vmatpush.msra.mxu0 0.0
        %740 = vmatpush.msra.mxu0 0.0
        %741 = vmatpush.msra.mxu0 0.0
        %742 = vmatpush.msra.mxu0 0.0
        %743 = vmatpush.msra.mxu0 0.0
        %744 = vmatpush.msra.mxu0 0.0
        %745 = vmatpush.msra.mxu0 0.0
        %746 = vmatpush.msra.mxu0 %v727
        %747 = vmatmul.f32.gmra.mxu0 %v725
        %v748 = vpop.f32.mrf.mxu0
        %v749 = vadd.f32 0.0, %v748
        %750 = vdwg.mxu0
        %751 = vmatpush.msra.mxu0 0.0
        %752 = vmatpush.msra.mxu0 0.0
        %753 = vmatpush.msra.mxu0 0.0
        %754 = vmatpush.msra.mxu0 0.0
        %755 = vmatpush.msra.mxu0 0.0
        %756 = vmatpush.msra.mxu0 0.0
        %757 = vmatpush.msra.mxu0 0.0
        %758 = vmatpush.msra.mxu0 0.0
        %759 = vmatpush.msra.mxu0 0.0
        %760 = vmatpush.msra.mxu0 0.0
        %761 = vmatpush.msra.mxu0 0.0
        %762 = vmatpush.msra.mxu0 0.0
        %763 = vmatpush.msra.mxu0 0.0
        %764 = vmatpush.msra.mxu0 0.0
        %765 = vmatpush.msra.mxu0 0.0
        %766 = vmatpush.msra.mxu0 %v729
        %767 = vmatmul.f32.gmra.mxu0 %v725
        %v768 = vpop.f32.mrf.mxu0
        %v769 = vadd.f32 0.0, %v768
        %770 = vdwg.mxu0
        %v771 = vadd.f32 %v694, %v749
        %v772 = vadd.f32 %v695, %v769
        %v773 = vld [vmem:[#allocation2] sm:$0xff]
        %v774 = vld [vmem:[#allocation2 + $0x8] sm:$0xf]
        %775 = vrot.lane.b32.xlu0 %v349, 32
        %v776 = vpop.permute.xlu0 %775
        %v777 = vrot.slane %v776, 4
        %vm778 = vcmask 261120
        %v779 = vsel %vm778, %v777, %v776
        %v782 = vmul.f32 %v773, %v779
        %v783 = vmul.f32 %v774, %v777
        %786 = vst [vmem:[#allocation1] ss:$2 sm:$0xff] %v782
        %s787 = scalar_lea.vmem [#allocation1], 16
        %788 = vst [vmem:[%s787] ss:$2 sm:$0xff] %v783
        %v789 = vld.sshfl [vmem:[#allocation1] sm:$0xff pattern:$0x75316420]
        %v790 = vld.sshfl [vmem:[#allocation1 + $0x8] sm:$0xff pattern:$0x75316420]
        %v791 = vld.sshfl [vmem:[#allocation1 + $0x10] sm:$0xff pattern:$0x75316420]
        %792 = vrot.lane.b32.xlu0 %v789, 96
        %v793 = vpop.permute.xlu0 %792
        %794 = vrot.lane.b32.xlu0 %v790, 96
        %v795 = vpop.permute.xlu0 %794
        %796 = vrot.lane.b32.xlu0 %v791, 96
        %v797 = vpop.permute.xlu0 %796
        %vm798 = vcmask 785408
        %v799 = vsel %vm798, %v793, %v795
        %v800 = vsel %vm798, %v795, %v797
        %v802 = vsel %vm370, %v315, 0
        %v804 = vsel %vm348, %v799, 0
        %v806 = vsel %vm348, %v800, 0
        %808 = vmatpush.msra.mxu0 0.0
        %809 = vmatpush.msra.mxu0 0.0
        %810 = vmatpush.msra.mxu0 0.0
        %811 = vmatpush.msra.mxu0 0.0
        %812 = vmatpush.msra.mxu0 0.0
        %813 = vmatpush.msra.mxu0 0.0
        %814 = vmatpush.msra.mxu0 0.0
        %815 = vmatpush.msra.mxu0 0.0
        %816 = vmatpush.msra.mxu0 0.0
        %817 = vmatpush.msra.mxu0 0.0
        %818 = vmatpush.msra.mxu0 0.0
        %819 = vmatpush.msra.mxu0 0.0
        %820 = vmatpush.msra.mxu0 0.0
        %821 = vmatpush.msra.mxu0 0.0
        %822 = vmatpush.msra.mxu0 0.0
        %823 = vmatpush.msra.mxu0 %v804
        %824 = vmatmul.f32.gmra.mxu0 %v802
        %v825 = vpop.f32.mrf.mxu0
        %v826 = vadd.f32 0.0, %v825
        %827 = vdwg.mxu0
        %828 = vmatpush.msra.mxu0 0.0
        %829 = vmatpush.msra.mxu0 0.0
        %830 = vmatpush.msra.mxu0 0.0
        %831 = vmatpush.msra.mxu0 0.0
        %832 = vmatpush.msra.mxu0 0.0
        %833 = vmatpush.msra.mxu0 0.0
        %834 = vmatpush.msra.mxu0 0.0
        %835 = vmatpush.msra.mxu0 0.0
        %836 = vmatpush.msra.mxu0 0.0
        %837 = vmatpush.msra.mxu0 0.0
        %838 = vmatpush.msra.mxu0 0.0
        %839 = vmatpush.msra.mxu0 0.0
        %840 = vmatpush.msra.mxu0 0.0
        %841 = vmatpush.msra.mxu0 0.0
        %842 = vmatpush.msra.mxu0 0.0
        %843 = vmatpush.msra.mxu0 %v806
        %844 = vmatmul.f32.gmra.mxu0 %v802
        %v845 = vpop.f32.mrf.mxu0
        %v846 = vadd.f32 0.0, %v845
        %847 = vdwg.mxu0
        %v848 = vadd.f32 %v771, %v826
        %v849 = vadd.f32 %v772, %v846
        %v850 = vld [vmem:[#allocation2] sm:$0xff]
        %v851 = vld [vmem:[#allocation2 + $0x8] sm:$0xf]
        %854 = vst [vmem:[#allocation1] ss:$2 sm:$0xff] %v850
        %s855 = scalar_lea.vmem [#allocation1], 16
        %856 = vst [vmem:[%s855] ss:$2 sm:$0xff] %v851
        %v857 = vld.sshfl [vmem:[#allocation1] sm:$0xff pattern:$0x75316420]
        %v858 = vld.sshfl [vmem:[#allocation1 + $0x8] sm:$0xff pattern:$0x75316420]
        %v859 = vld.sshfl [vmem:[#allocation1 + $0x10] sm:$0xff pattern:$0x75316420]
        %860 = vrot.lane.b32.xlu0 %v857, 95
        %v861 = vpop.permute.xlu0 %860
        %862 = vrot.lane.b32.xlu0 %v858, 95
        %v863 = vpop.permute.xlu0 %862
        %864 = vrot.lane.b32.xlu0 %v859, 95
        %v865 = vpop.permute.xlu0 %864
        %vm866 = vcmask 777216
        %v867 = vsel %vm866, %v861, %v863
        %v868 = vsel %vm866, %v863, %v865
        %v870 = vsel %vm370, %v316, 0
        %v872 = vsel %vm348, %v867, 0
        %v874 = vsel %vm348, %v868, 0
        %876 = vmatpush.msra.mxu0 0.0
        %877 = vmatpush.msra.mxu0 0.0
        %878 = vmatpush.msra.mxu0 0.0
        %879 = vmatpush.msra.mxu0 0.0
        %880 = vmatpush.msra.mxu0 0.0
        %881 = vmatpush.msra.mxu0 0.0
        %882 = vmatpush.msra.mxu0 0.0
        %883 = vmatpush.msra.mxu0 0.0
        %884 = vmatpush.msra.mxu0 0.0
        %885 = vmatpush.msra.mxu0 0.0
        %886 = vmatpush.msra.mxu0 0.0
        %887 = vmatpush.msra.mxu0 0.0
        %888 = vmatpush.msra.mxu0 0.0
        %889 = vmatpush.msra.mxu0 0.0
        %890 = vmatpush.msra.mxu0 0.0
        %891 = vmatpush.msra.mxu0 %v872
        %892 = vmatmul.f32.gmra.mxu0 %v870
        %v893 = vpop.f32.mrf.mxu0
        %v894 = vadd.f32 0.0, %v893
        %895 = vdwg.mxu0
        %896 = vmatpush.msra.mxu0 0.0
        %897 = vmatpush.msra.mxu0 0.0
        %898 = vmatpush.msra.mxu0 0.0
        %899 = vmatpush.msra.mxu0 0.0
        %900 = vmatpush.msra.mxu0 0.0
        %901 = vmatpush.msra.mxu0 0.0
        %902 = vmatpush.msra.mxu0 0.0
        %903 = vmatpush.msra.mxu0 0.0
        %904 = vmatpush.msra.mxu0 0.0
        %905 = vmatpush.msra.mxu0 0.0
        %906 = vmatpush.msra.mxu0 0.0
        %907 = vmatpush.msra.mxu0 0.0
        %908 = vmatpush.msra.mxu0 0.0
        %909 = vmatpush.msra.mxu0 0.0
        %910 = vmatpush.msra.mxu0 0.0
        %911 = vmatpush.msra.mxu0 %v874
        %912 = vmatmul.f32.gmra.mxu0 %v870
        %v913 = vpop.f32.mrf.mxu0
        %v914 = vadd.f32 0.0, %v913
        %915 = vdwg.mxu0
        %v916 = vadd.f32 %v848, %v894
        %v917 = vadd.f32 %v849, %v914
        %v918 = vld [vmem:[#allocation2] sm:$0xff]
        %v919 = vld [vmem:[#allocation2 + $0x8] sm:$0xf]
        %920 = vrot.lane.b32.xlu0 %v475, 34
        %v921 = vpop.permute.xlu0 %920
        %v922 = vrot.slane %v921, 4
        %vm923 = vcmask 277504
        %v924 = vsel %vm923, %v922, %v921
        %v927 = vmul.f32 %v918, %v924
        %v928 = vmul.f32 %v919, %v922
        %931 = vst [vmem:[#allocation1] ss:$2 sm:$0xff] %v927
        %s932 = scalar_lea.vmem [#allocation1], 16
        %933 = vst [vmem:[%s932] ss:$2 sm:$0xff] %v928
        %v934 = vld.sshfl [vmem:[#allocation1] sm:$0xff pattern:$0x75316420]
        %v935 = vld.sshfl [vmem:[#allocation1 + $0x8] sm:$0xff pattern:$0x75316420]
        %v936 = vld.sshfl [vmem:[#allocation1 + $0x10] sm:$0xff pattern:$0x75316420]
        %937 = vrot.lane.b32.xlu0 %v934, 94
        %v938 = vpop.permute.xlu0 %937
        %939 = vrot.lane.b32.xlu0 %v935, 94
        %v940 = vpop.permute.xlu0 %939
        %941 = vrot.lane.b32.xlu0 %v936, 94
        %v942 = vpop.permute.xlu0 %941
        %vm943 = vcmask 769024
        %v944 = vsel %vm943, %v938, %v940
        %v945 = vsel %vm943, %v940, %v942
        %v947 = vsel %vm370, %v317, 0
        %v949 = vsel %vm348, %v944, 0
        %v951 = vsel %vm348, %v945, 0
        %953 = vmatpush.msra.mxu0 0.0
        %954 = vmatpush.msra.mxu0 0.0
        %955 = vmatpush.msra.mxu0 0.0
        %956 = vmatpush.msra.mxu0 0.0
        %957 = vmatpush.msra.mxu0 0.0
        %958 = vmatpush.msra.mxu0 0.0
        %959 = vmatpush.msra.mxu0 0.0
        %960 = vmatpush.msra.mxu0 0.0
        %961 = vmatpush.msra.mxu0 0.0
        %962 = vmatpush.msra.mxu0 0.0
        %963 = vmatpush.msra.mxu0 0.0
        %964 = vmatpush.msra.mxu0 0.0
        %965 = vmatpush.msra.mxu0 0.0
        %966 = vmatpush.msra.mxu0 0.0
        %967 = vmatpush.msra.mxu0 0.0
        %968 = vmatpush.msra.mxu0 %v949
        %969 = vmatmul.f32.gmra.mxu0 %v947
        %v970 = vpop.f32.mrf.mxu0
        %v971 = vadd.f32 0.0, %v970
        %972 = vdwg.mxu0
        %973 = vmatpush.msra.mxu0 0.0
        %974 = vmatpush.msra.mxu0 0.0
        %975 = vmatpush.msra.mxu0 0.0
        %976 = vmatpush.msra.mxu0 0.0
        %977 = vmatpush.msra.mxu0 0.0
        %978 = vmatpush.msra.mxu0 0.0
        %979 = vmatpush.msra.mxu0 0.0
        %980 = vmatpush.msra.mxu0 0.0
        %981 = vmatpush.msra.mxu0 0.0
        %982 = vmatpush.msra.mxu0 0.0
        %983 = vmatpush.msra.mxu0 0.0
        %984 = vmatpush.msra.mxu0 0.0
        %985 = vmatpush.msra.mxu0 0.0
        %986 = vmatpush.msra.mxu0 0.0
        %987 = vmatpush.msra.mxu0 0.0
        %988 = vmatpush.msra.mxu0 %v951
        %989 = vmatmul.f32.gmra.mxu0 %v947
        %v990 = vpop.f32.mrf.mxu0
        %v991 = vadd.f32 0.0, %v990
        %992 = vdwg.mxu0
        %v993 = vadd.f32 %v916, %v971
        %v994 = vadd.f32 %v917, %v991
        %v995 = vld [vmem:[%s3] sm:$0xf]
        %997 = vset.pattern.permute.xlu0 0
        %998 = vperm.xlu0 %997, %v995
        %v999 = vpop.permute.xlu0 %998
        %v1001 = vmul.f32 %v993, %v999
        %v1002 = vmul.f32 %v994, %v999
        %v1003 = vld [vmem:[%s4] sm:$0xf]
        %1005 = vset.pattern.permute.xlu0 0
        %1006 = vperm.xlu0 %1005, %v1003
        %v1007 = vpop.permute.xlu0 %1006
        %v1009 = vadd.f32 %v1001, %v1007
        %v1010 = vadd.f32 %v1002, %v1007
        %v1011 = vmax.f32 %v1009, 0.0
        %v1012 = vmax.f32 %v1010, 0.0
        %v1015 = vrot.slane %v1012, 4
        %v1016 = vsel %vm348, %v1011, %v1015
        %1017 = vrot.lane.b32.xlu0 %v1016, 17
        %v1018 = vpop.permute.xlu0 %1017
        %v1019 = vrot.slane %v1018, 4
        %v1020 = vsel %vm334, %v1019, %v1018
        %1023 = vst.msk [vmem:[#allocation2] sm:$0xff] %vm340, %v1020
        %1024 = vst.msk [vmem:[#allocation2 + $0x8] sm:$0xf] %vm304, %v1019
        %v1025 = vld [vmem:[#allocation2] sm:$0xff]
        %v1026 = vmul.f32 %v1025, %v349
        %v1027 = vld [vmem:[#allocation2 + $0x8] sm:$0xf]
        %1030 = vst [vmem:[#allocation1] ss:$2 sm:$0xff] %v1025
        %s1031 = scalar_lea.vmem [#allocation1], 16
        %1032 = vst [vmem:[%s1031] ss:$2 sm:$0xff] %v1027
        %v1033 = vld.sshfl [vmem:[#allocation1] sm:$0xff pattern:$0x75316420]
        %v1034 = vld.sshfl [vmem:[#allocation1 + $0x8] sm:$0xff pattern:$0x75316420]
        %v1035 = vld.sshfl [vmem:[#allocation1 + $0x10] sm:$0xff pattern:$0x75316420]
        %1036 = vrot.lane.b32.xlu0 %v1033, 127
        %v1037 = vpop.permute.xlu0 %1036
        %1038 = vrot.lane.b32.xlu0 %v1034, 127
        %v1039 = vpop.permute.xlu0 %1038
        %1040 = vrot.lane.b32.xlu0 %v1035, 127
        %v1041 = vpop.permute.xlu0 %1040
        %v1042 = vsel %vm367, %v1037, %v1039
        %v1043 = vsel %vm367, %v1039, %v1041
        %v1045 = vsel %vm370, %v319, 0
        %v1047 = vsel %vm348, %v1042, 0
        %v1049 = vsel %vm348, %v1043, 0
        %1051 = vmatpush.msra.mxu0 0.0
        %1052 = vmatpush.msra.mxu0 0.0
        %1053 = vmatpush.msra.mxu0 0.0
        %1054 = vmatpush.msra.mxu0 0.0
        %1055 = vmatpush.msra.mxu0 0.0
        %1056 = vmatpush.msra.mxu0 0.0
        %1057 = vmatpush.msra.mxu0 0.0
        %1058 = vmatpush.msra.mxu0 0.0
        %1059 = vmatpush.msra.mxu0 0.0
        %1060 = vmatpush.msra.mxu0 0.0
        %1061 = vmatpush.msra.mxu0 0.0
        %1062 = vmatpush.msra.mxu0 0.0
        %1063 = vmatpush.msra.mxu0 0.0
        %1064 = vmatpush.msra.mxu0 0.0
        %1065 = vmatpush.msra.mxu0 0.0
        %1066 = vmatpush.msra.mxu0 %v1047
        %1067 = vmatmul.f32.gmra.mxu0 %v1045
        %v1068 = vpop.f32.mrf.mxu0
        %v1069 = vadd.f32 0.0, %v1068
        %1070 = vdwg.mxu0
        %1071 = vmatpush.msra.mxu0 0.0
        %1072 = vmatpush.msra.mxu0 0.0
        %1073 = vmatpush.msra.mxu0 0.0
        %1074 = vmatpush.msra.mxu0 0.0
        %1075 = vmatpush.msra.mxu0 0.0
        %1076 = vmatpush.msra.mxu0 0.0
        %1077 = vmatpush.msra.mxu0 0.0
        %1078 = vmatpush.msra.mxu0 0.0
        %1079 = vmatpush.msra.mxu0 0.0
        %1080 = vmatpush.msra.mxu0 0.0
        %1081 = vmatpush.msra.mxu0 0.0
        %1082 = vmatpush.msra.mxu0 0.0
        %1083 = vmatpush.msra.mxu0 0.0
        %1084 = vmatpush.msra.mxu0 0.0
        %1085 = vmatpush.msra.mxu0 0.0
        %1086 = vmatpush.msra.mxu0 %v1049
        %1087 = vmatmul.f32.gmra.mxu0 %v1045
        %v1088 = vpop.f32.mrf.mxu0
        %v1089 = vadd.f32 0.0, %v1088
        %1090 = vdwg.mxu0
        %1092 = vst [vmem:[#allocation1] ss:$2 sm:$0xff] %v1026
        %v1093 = vld.sshfl [vmem:[#allocation1] sm:$0xff pattern:$0x75316420]
        %v1094 = vld.sshfl [vmem:[#allocation1 + $0x8] sm:$0xff pattern:$0x75316420]
        %v1096 = vsel %vm370, %v318, 0
        %v1098 = vsel %vm348, %v1093, 0
        %v1100 = vsel %vm348, %v1094, 0
        %1102 = vmatpush.msra.mxu0 0.0
        %1103 = vmatpush.msra.mxu0 0.0
        %1104 = vmatpush.msra.mxu0 0.0
        %1105 = vmatpush.msra.mxu0 0.0
        %1106 = vmatpush.msra.mxu0 0.0
        %1107 = vmatpush.msra.mxu0 0.0
        %1108 = vmatpush.msra.mxu0 0.0
        %1109 = vmatpush.msra.mxu0 0.0
        %1110 = vmatpush.msra.mxu0 0.0
        %1111 = vmatpush.msra.mxu0 0.0
        %1112 = vmatpush.msra.mxu0 0.0
        %1113 = vmatpush.msra.mxu0 0.0
        %1114 = vmatpush.msra.mxu0 0.0
        %1115 = vmatpush.msra.mxu0 0.0
        %1116 = vmatpush.msra.mxu0 0.0
        %1117 = vmatpush.msra.mxu0 %v1098
        %1118 = vmatmul.f32.gmra.mxu0 %v1096
        %v1119 = vpop.f32.mrf.mxu0
        %v1120 = vadd.f32 %v1069, %v1119
        %1121 = vdwg.mxu0
        %1122 = vmatpush.msra.mxu0 0.0
        %1123 = vmatpush.msra.mxu0 0.0
        %1124 = vmatpush.msra.mxu0 0.0
        %1125 = vmatpush.msra.mxu0 0.0
        %1126 = vmatpush.msra.mxu0 0.0
        %1127 = vmatpush.msra.mxu0 0.0
        %1128 = vmatpush.msra.mxu0 0.0
        %1129 = vmatpush.msra.mxu0 0.0
        %1130 = vmatpush.msra.mxu0 0.0
        %1131 = vmatpush.msra.mxu0 0.0
        %1132 = vmatpush.msra.mxu0 0.0
        %1133 = vmatpush.msra.mxu0 0.0
        %1134 = vmatpush.msra.mxu0 0.0
        %1135 = vmatpush.msra.mxu0 0.0
        %1136 = vmatpush.msra.mxu0 0.0
        %1137 = vmatpush.msra.mxu0 %v1100
        %1138 = vmatmul.f32.gmra.mxu0 %v1096
        %v1139 = vpop.f32.mrf.mxu0
        %v1140 = vadd.f32 %v1089, %v1139
        %1141 = vdwg.mxu0
        %v1142 = vld [vmem:[#allocation2] sm:$0xff]
        %v1143 = vld [vmem:[#allocation2 + $0x8] sm:$0xf]
        %v1144 = vmul.f32 %v1142, %v480
        %v1145 = vmul.f32 %v1143, %v478
        %1148 = vst [vmem:[#allocation1] ss:$2 sm:$0xff] %v1144
        %s1149 = scalar_lea.vmem [#allocation1], 16
        %1150 = vst [vmem:[%s1149] ss:$2 sm:$0xff] %v1145
        %v1151 = vld.sshfl [vmem:[#allocation1] sm:$0xff pattern:$0x75316420]
        %v1152 = vld.sshfl [vmem:[#allocation1 + $0x8] sm:$0xff pattern:$0x75316420]
        %v1153 = vld.sshfl [vmem:[#allocation1 + $0x10] sm:$0xff pattern:$0x75316420]
        %1154 = vrot.lane.b32.xlu0 %v1151, 126
        %v1155 = vpop.permute.xlu0 %1154
        %1156 = vrot.lane.b32.xlu0 %v1152, 126
        %v1157 = vpop.permute.xlu0 %1156
        %1158 = vrot.lane.b32.xlu0 %v1153, 126
        %v1159 = vpop.permute.xlu0 %1158
        %v1160 = vsel %vm499, %v1155, %v1157
        %v1161 = vsel %vm499, %v1157, %v1159
        %v1163 = vsel %vm370, %v320, 0
        %v1165 = vsel %vm348, %v1160, 0
        %v1167 = vsel %vm348, %v1161, 0
        %1169 = vmatpush.msra.mxu0 0.0
        %1170 = vmatpush.msra.mxu0 0.0
        %1171 = vmatpush.msra.mxu0 0.0
        %1172 = vmatpush.msra.mxu0 0.0
        %1173 = vmatpush.msra.mxu0 0.0
        %1174 = vmatpush.msra.mxu0 0.0
        %1175 = vmatpush.msra.mxu0 0.0
        %1176 = vmatpush.msra.mxu0 0.0
        %1177 = vmatpush.msra.mxu0 0.0
        %1178 = vmatpush.msra.mxu0 0.0
        %1179 = vmatpush.msra.mxu0 0.0
        %1180 = vmatpush.msra.mxu0 0.0
        %1181 = vmatpush.msra.mxu0 0.0
        %1182 = vmatpush.msra.mxu0 0.0
        %1183 = vmatpush.msra.mxu0 0.0
        %1184 = vmatpush.msra.mxu0 %v1165
        %1185 = vmatmul.f32.gmra.mxu0 %v1163
        %v1186 = vpop.f32.mrf.mxu0
        %v1187 = vadd.f32 0.0, %v1186
        %1188 = vdwg.mxu0
        %1189 = vmatpush.msra.mxu0 0.0
        %1190 = vmatpush.msra.mxu0 0.0
        %1191 = vmatpush.msra.mxu0 0.0
        %1192 = vmatpush.msra.mxu0 0.0
        %1193 = vmatpush.msra.mxu0 0.0
        %1194 = vmatpush.msra.mxu0 0.0
        %1195 = vmatpush.msra.mxu0 0.0
        %1196 = vmatpush.msra.mxu0 0.0
        %1197 = vmatpush.msra.mxu0 0.0
        %1198 = vmatpush.msra.mxu0 0.0
        %1199 = vmatpush.msra.mxu0 0.0
        %1200 = vmatpush.msra.mxu0 0.0
        %1201 = vmatpush.msra.mxu0 0.0
        %1202 = vmatpush.msra.mxu0 0.0
        %1203 = vmatpush.msra.mxu0 0.0
        %1204 = vmatpush.msra.mxu0 %v1167
        %1205 = vmatmul.f32.gmra.mxu0 %v1163
        %v1206 = vpop.f32.mrf.mxu0
        %v1207 = vadd.f32 0.0, %v1206
        %1208 = vdwg.mxu0
        %v1209 = vadd.f32 %v1120, %v1187
        %v1210 = vadd.f32 %v1140, %v1207
        %v1211 = vld [vmem:[#allocation2] sm:$0xff]
        %v1212 = vld [vmem:[#allocation2 + $0x8] sm:$0xf]
        %v1213 = vmul.f32 %v1211, %v557
        %v1214 = vmul.f32 %v1212, %v555
        %1217 = vst [vmem:[#allocation1] ss:$2 sm:$0xff] %v1213
        %s1218 = scalar_lea.vmem [#allocation1], 16
        %1219 = vst [vmem:[%s1218] ss:$2 sm:$0xff] %v1214
        %v1220 = vld.sshfl [vmem:[#allocation1] sm:$0xff pattern:$0x75316420]
        %v1221 = vld.sshfl [vmem:[#allocation1 + $0x8] sm:$0xff pattern:$0x75316420]
        %v1222 = vld.sshfl [vmem:[#allocation1 + $0x10] sm:$0xff pattern:$0x75316420]
        %1223 = vrot.lane.b32.xlu0 %v1220, 112
        %v1224 = vpop.permute.xlu0 %1223
        %1225 = vrot.lane.b32.xlu0 %v1221, 112
        %v1226 = vpop.permute.xlu0 %1225
        %1227 = vrot.lane.b32.xlu0 %v1222, 112
        %v1228 = vpop.permute.xlu0 %1227
        %v1229 = vsel %vm576, %v1224, %v1226
        %v1230 = vsel %vm576, %v1226, %v1228
        %v1232 = vsel %vm370, %v321, 0
        %v1234 = vsel %vm348, %v1229, 0
        %v1236 = vsel %vm348, %v1230, 0
        %1238 = vmatpush.msra.mxu0 0.0
        %1239 = vmatpush.msra.mxu0 0.0
        %1240 = vmatpush.msra.mxu0 0.0
        %1241 = vmatpush.msra.mxu0 0.0
        %1242 = vmatpush.msra.mxu0 0.0
        %1243 = vmatpush.msra.mxu0 0.0
        %1244 = vmatpush.msra.mxu0 0.0
        %1245 = vmatpush.msra.mxu0 0.0
        %1246 = vmatpush.msra.mxu0 0.0
        %1247 = vmatpush.msra.mxu0 0.0
        %1248 = vmatpush.msra.mxu0 0.0
        %1249 = vmatpush.msra.mxu0 0.0
        %1250 = vmatpush.msra.mxu0 0.0
        %1251 = vmatpush.msra.mxu0 0.0
        %1252 = vmatpush.msra.mxu0 0.0
        %1253 = vmatpush.msra.mxu0 %v1234
        %1254 = vmatmul.f32.gmra.mxu0 %v1232
        %v1255 = vpop.f32.mrf.mxu0
        %v1256 = vadd.f32 0.0, %v1255
        %1257 = vdwg.mxu0
        %1258 = vmatpush.msra.mxu0 0.0
        %1259 = vmatpush.msra.mxu0 0.0
        %1260 = vmatpush.msra.mxu0 0.0
        %1261 = vmatpush.msra.mxu0 0.0
        %1262 = vmatpush.msra.mxu0 0.0
        %1263 = vmatpush.msra.mxu0 0.0
        %1264 = vmatpush.msra.mxu0 0.0
        %1265 = vmatpush.msra.mxu0 0.0
        %1266 = vmatpush.msra.mxu0 0.0
        %1267 = vmatpush.msra.mxu0 0.0
        %1268 = vmatpush.msra.mxu0 0.0
        %1269 = vmatpush.msra.mxu0 0.0
        %1270 = vmatpush.msra.mxu0 0.0
        %1271 = vmatpush.msra.mxu0 0.0
        %1272 = vmatpush.msra.mxu0 0.0
        %1273 = vmatpush.msra.mxu0 %v1236
        %1274 = vmatmul.f32.gmra.mxu0 %v1232
        %v1275 = vpop.f32.mrf.mxu0
        %v1276 = vadd.f32 0.0, %v1275
        %1277 = vdwg.mxu0
        %v1278 = vadd.f32 %v1209, %v1256
        %v1279 = vadd.f32 %v1210, %v1276
        %v1280 = vld [vmem:[#allocation2] sm:$0xff]
        %v1281 = vld [vmem:[#allocation2 + $0x8] sm:$0xf]
        %1284 = vst [vmem:[#allocation1] ss:$2 sm:$0xff] %v1280
        %s1285 = scalar_lea.vmem [#allocation1], 16
        %1286 = vst [vmem:[%s1285] ss:$2 sm:$0xff] %v1281
        %v1287 = vld.sshfl [vmem:[#allocation1] sm:$0xff pattern:$0x75316420]
        %v1288 = vld.sshfl [vmem:[#allocation1 + $0x8] sm:$0xff pattern:$0x75316420]
        %v1289 = vld.sshfl [vmem:[#allocation1 + $0x10] sm:$0xff pattern:$0x75316420]
        %1290 = vrot.lane.b32.xlu0 %v1287, 111
        %v1291 = vpop.permute.xlu0 %1290
        %1292 = vrot.lane.b32.xlu0 %v1288, 111
        %v1293 = vpop.permute.xlu0 %1292
        %1294 = vrot.lane.b32.xlu0 %v1289, 111
        %v1295 = vpop.permute.xlu0 %1294
        %v1296 = vsel %vm644, %v1291, %v1293
        %v1297 = vsel %vm644, %v1293, %v1295
        %v1299 = vsel %vm370, %v322, 0
        %v1301 = vsel %vm348, %v1296, 0
        %v1303 = vsel %vm348, %v1297, 0
        %1305 = vmatpush.msra.mxu0 0.0
        %1306 = vmatpush.msra.mxu0 0.0
        %1307 = vmatpush.msra.mxu0 0.0
        %1308 = vmatpush.msra.mxu0 0.0
        %1309 = vmatpush.msra.mxu0 0.0
        %1310 = vmatpush.msra.mxu0 0.0
        %1311 = vmatpush.msra.mxu0 0.0
        %1312 = vmatpush.msra.mxu0 0.0
        %1313 = vmatpush.msra.mxu0 0.0
        %1314 = vmatpush.msra.mxu0 0.0
        %1315 = vmatpush.msra.mxu0 0.0
        %1316 = vmatpush.msra.mxu0 0.0
        %1317 = vmatpush.msra.mxu0 0.0
        %1318 = vmatpush.msra.mxu0 0.0
        %1319 = vmatpush.msra.mxu0 0.0
        %1320 = vmatpush.msra.mxu0 %v1301
        %1321 = vmatmul.f32.gmra.mxu0 %v1299
        %v1322 = vpop.f32.mrf.mxu0
        %v1323 = vadd.f32 0.0, %v1322
        %1324 = vdwg.mxu0
        %1325 = vmatpush.msra.mxu0 0.0
        %1326 = vmatpush.msra.mxu0 0.0
        %1327 = vmatpush.msra.mxu0 0.0
        %1328 = vmatpush.msra.mxu0 0.0
        %1329 = vmatpush.msra.mxu0 0.0
        %1330 = vmatpush.msra.mxu0 0.0
        %1331 = vmatpush.msra.mxu0 0.0
        %1332 = vmatpush.msra.mxu0 0.0
        %1333 = vmatpush.msra.mxu0 0.0
        %1334 = vmatpush.msra.mxu0 0.0
        %1335 = vmatpush.msra.mxu0 0.0
        %1336 = vmatpush.msra.mxu0 0.0
        %1337 = vmatpush.msra.mxu0 0.0
        %1338 = vmatpush.msra.mxu0 0.0
        %1339 = vmatpush.msra.mxu0 0.0
        %1340 = vmatpush.msra.mxu0 %v1303
        %1341 = vmatmul.f32.gmra.mxu0 %v1299
        %v1342 = vpop.f32.mrf.mxu0
        %v1343 = vadd.f32 0.0, %v1342
        %1344 = vdwg.mxu0
        %v1345 = vadd.f32 %v1278, %v1323
        %v1346 = vadd.f32 %v1279, %v1343
        %v1347 = vld [vmem:[#allocation2] sm:$0xff]
        %v1348 = vld [vmem:[#allocation2 + $0x8] sm:$0xf]
        %v1349 = vmul.f32 %v1347, %v702
        %v1350 = vmul.f32 %v1348, %v700
        %1353 = vst [vmem:[#allocation1] ss:$2 sm:$0xff] %v1349
        %s1354 = scalar_lea.vmem [#allocation1], 16
        %1355 = vst [vmem:[%s1354] ss:$2 sm:$0xff] %v1350
        %v1356 = vld.sshfl [vmem:[#allocation1] sm:$0xff pattern:$0x75316420]
        %v1357 = vld.sshfl [vmem:[#allocation1 + $0x8] sm:$0xff pattern:$0x75316420]
        %v1358 = vld.sshfl [vmem:[#allocation1 + $0x10] sm:$0xff pattern:$0x75316420]
        %1359 = vrot.lane.b32.xlu0 %v1356, 110
        %v1360 = vpop.permute.xlu0 %1359
        %1361 = vrot.lane.b32.xlu0 %v1357, 110
        %v1362 = vpop.permute.xlu0 %1361
        %1363 = vrot.lane.b32.xlu0 %v1358, 110
        %v1364 = vpop.permute.xlu0 %1363
        %v1365 = vsel %vm721, %v1360, %v1362
        %v1366 = vsel %vm721, %v1362, %v1364
        %v1368 = vsel %vm370, %v323, 0
        %v1370 = vsel %vm348, %v1365, 0
        %v1372 = vsel %vm348, %v1366, 0
        %1374 = vmatpush.msra.mxu0 0.0
        %1375 = vmatpush.msra.mxu0 0.0
        %1376 = vmatpush.msra.mxu0 0.0
        %1377 = vmatpush.msra.mxu0 0.0
        %1378 = vmatpush.msra.mxu0 0.0
        %1379 = vmatpush.msra.mxu0 0.0
        %1380 = vmatpush.msra.mxu0 0.0
        %1381 = vmatpush.msra.mxu0 0.0
        %1382 = vmatpush.msra.mxu0 0.0
        %1383 = vmatpush.msra.mxu0 0.0
        %1384 = vmatpush.msra.mxu0 0.0
        %1385 = vmatpush.msra.mxu0 0.0
        %1386 = vmatpush.msra.mxu0 0.0
        %1387 = vmatpush.msra.mxu0 0.0
        %1388 = vmatpush.msra.mxu0 0.0
        %1389 = vmatpush.msra.mxu0 %v1370
        %1390 = vmatmul.f32.gmra.mxu0 %v1368
        %v1391 = vpop.f32.mrf.mxu0
        %v1392 = vadd.f32 0.0, %v1391
        %1393 = vdwg.mxu0
        %1394 = vmatpush.msra.mxu0 0.0
        %1395 = vmatpush.msra.mxu0 0.0
        %1396 = vmatpush.msra.mxu0 0.0
        %1397 = vmatpush.msra.mxu0 0.0
        %1398 = vmatpush.msra.mxu0 0.0
        %1399 = vmatpush.msra.mxu0 0.0
        %1400 = vmatpush.msra.mxu0 0.0
        %1401 = vmatpush.msra.mxu0 0.0
        %1402 = vmatpush.msra.mxu0 0.0
        %1403 = vmatpush.msra.mxu0 0.0
        %1404 = vmatpush.msra.mxu0 0.0
        %1405 = vmatpush.msra.mxu0 0.0
        %1406 = vmatpush.msra.mxu0 0.0
        %1407 = vmatpush.msra.mxu0 0.0
        %1408 = vmatpush.msra.mxu0 0.0
        %1409 = vmatpush.msra.mxu0 %v1372
        %1410 = vmatmul.f32.gmra.mxu0 %v1368
        %v1411 = vpop.f32.mrf.mxu0
        %v1412 = vadd.f32 0.0, %v1411
        %1413 = vdwg.mxu0
        %v1414 = vadd.f32 %v1345, %v1392
        %v1415 = vadd.f32 %v1346, %v1412
        %v1416 = vld [vmem:[#allocation2] sm:$0xff]
        %v1417 = vld [vmem:[#allocation2 + $0x8] sm:$0xf]
        %v1418 = vmul.f32 %v1416, %v779
        %v1419 = vmul.f32 %v1417, %v777
        %1422 = vst [vmem:[#allocation1] ss:$2 sm:$0xff] %v1418
        %s1423 = scalar_lea.vmem [#allocation1], 16
        %1424 = vst [vmem:[%s1423] ss:$2 sm:$0xff] %v1419
        %v1425 = vld.sshfl [vmem:[#allocation1] sm:$0xff pattern:$0x75316420]
        %v1426 = vld.sshfl [vmem:[#allocation1 + $0x8] sm:$0xff pattern:$0x75316420]
        %v1427 = vld.sshfl [vmem:[#allocation1 + $0x10] sm:$0xff pattern:$0x75316420]
        %1428 = vrot.lane.b32.xlu0 %v1425, 96
        %v1429 = vpop.permute.xlu0 %1428
        %1430 = vrot.lane.b32.xlu0 %v1426, 96
        %v1431 = vpop.permute.xlu0 %1430
        %1432 = vrot.lane.b32.xlu0 %v1427, 96
        %v1433 = vpop.permute.xlu0 %1432
        %v1434 = vsel %vm798, %v1429, %v1431
        %v1435 = vsel %vm798, %v1431, %v1433
        %v1437 = vsel %vm370, %v324, 0
        %v1439 = vsel %vm348, %v1434, 0
        %v1441 = vsel %vm348, %v1435, 0
        %1443 = vmatpush.msra.mxu0 0.0
        %1444 = vmatpush.msra.mxu0 0.0
        %1445 = vmatpush.msra.mxu0 0.0
        %1446 = vmatpush.msra.mxu0 0.0
        %1447 = vmatpush.msra.mxu0 0.0
        %1448 = vmatpush.msra.mxu0 0.0
        %1449 = vmatpush.msra.mxu0 0.0
        %1450 = vmatpush.msra.mxu0 0.0
        %1451 = vmatpush.msra.mxu0 0.0
        %1452 = vmatpush.msra.mxu0 0.0
        %1453 = vmatpush.msra.mxu0 0.0
        %1454 = vmatpush.msra.mxu0 0.0
        %1455 = vmatpush.msra.mxu0 0.0
        %1456 = vmatpush.msra.mxu0 0.0
        %1457 = vmatpush.msra.mxu0 0.0
        %1458 = vmatpush.msra.mxu0 %v1439
        %1459 = vmatmul.f32.gmra.mxu0 %v1437
        %v1460 = vpop.f32.mrf.mxu0
        %v1461 = vadd.f32 0.0, %v1460
        %1462 = vdwg.mxu0
        %1463 = vmatpush.msra.mxu0 0.0
        %1464 = vmatpush.msra.mxu0 0.0
        %1465 = vmatpush.msra.mxu0 0.0
        %1466 = vmatpush.msra.mxu0 0.0
        %1467 = vmatpush.msra.mxu0 0.0
        %1468 = vmatpush.msra.mxu0 0.0
        %1469 = vmatpush.msra.mxu0 0.0
        %1470 = vmatpush.msra.mxu0 0.0
        %1471 = vmatpush.msra.mxu0 0.0
        %1472 = vmatpush.msra.mxu0 0.0
        %1473 = vmatpush.msra.mxu0 0.0
        %1474 = vmatpush.msra.mxu0 0.0
        %1475 = vmatpush.msra.mxu0 0.0
        %1476 = vmatpush.msra.mxu0 0.0
        %1477 = vmatpush.msra.mxu0 0.0
        %1478 = vmatpush.msra.mxu0 %v1441
        %1479 = vmatmul.f32.gmra.mxu0 %v1437
        %v1480 = vpop.f32.mrf.mxu0
        %v1481 = vadd.f32 0.0, %v1480
        %1482 = vdwg.mxu0
        %v1483 = vadd.f32 %v1414, %v1461
        %v1484 = vadd.f32 %v1415, %v1481
        %v1485 = vld [vmem:[#allocation2] sm:$0xff]
        %v1486 = vld [vmem:[#allocation2 + $0x8] sm:$0xf]
        %1489 = vst [vmem:[#allocation1] ss:$2 sm:$0xff] %v1485
        %s1490 = scalar_lea.vmem [#allocation1], 16
        %1491 = vst [vmem:[%s1490] ss:$2 sm:$0xff] %v1486
        %v1492 = vld.sshfl [vmem:[#allocation1] sm:$0xff pattern:$0x75316420]
        %v1493 = vld.sshfl [vmem:[#allocation1 + $0x8] sm:$0xff pattern:$0x75316420]
        %v1494 = vld.sshfl [vmem:[#allocation1 + $0x10] sm:$0xff pattern:$0x75316420]
        %1495 = vrot.lane.b32.xlu0 %v1492, 95
        %v1496 = vpop.permute.xlu0 %1495
        %1497 = vrot.lane.b32.xlu0 %v1493, 95
        %v1498 = vpop.permute.xlu0 %1497
        %1499 = vrot.lane.b32.xlu0 %v1494, 95
        %v1500 = vpop.permute.xlu0 %1499
        %v1501 = vsel %vm866, %v1496, %v1498
        %v1502 = vsel %vm866, %v1498, %v1500
        %v1504 = vsel %vm370, %v325, 0
        %v1506 = vsel %vm348, %v1501, 0
        %v1508 = vsel %vm348, %v1502, 0
        %1510 = vmatpush.msra.mxu0 0.0
        %1511 = vmatpush.msra.mxu0 0.0
        %1512 = vmatpush.msra.mxu0 0.0
        %1513 = vmatpush.msra.mxu0 0.0
        %1514 = vmatpush.msra.mxu0 0.0
        %1515 = vmatpush.msra.mxu0 0.0
        %1516 = vmatpush.msra.mxu0 0.0
        %1517 = vmatpush.msra.mxu0 0.0
        %1518 = vmatpush.msra.mxu0 0.0
        %1519 = vmatpush.msra.mxu0 0.0
        %1520 = vmatpush.msra.mxu0 0.0
        %1521 = vmatpush.msra.mxu0 0.0
        %1522 = vmatpush.msra.mxu0 0.0
        %1523 = vmatpush.msra.mxu0 0.0
        %1524 = vmatpush.msra.mxu0 0.0
        %1525 = vmatpush.msra.mxu0 %v1506
        %1526 = vmatmul.f32.gmra.mxu0 %v1504
        %v1527 = vpop.f32.mrf.mxu0
        %v1528 = vadd.f32 0.0, %v1527
        %1529 = vdwg.mxu0
        %1530 = vmatpush.msra.mxu0 0.0
        %1531 = vmatpush.msra.mxu0 0.0
        %1532 = vmatpush.msra.mxu0 0.0
        %1533 = vmatpush.msra.mxu0 0.0
        %1534 = vmatpush.msra.mxu0 0.0
        %1535 = vmatpush.msra.mxu0 0.0
        %1536 = vmatpush.msra.mxu0 0.0
        %1537 = vmatpush.msra.mxu0 0.0
        %1538 = vmatpush.msra.mxu0 0.0
        %1539 = vmatpush.msra.mxu0 0.0
        %1540 = vmatpush.msra.mxu0 0.0
        %1541 = vmatpush.msra.mxu0 0.0
        %1542 = vmatpush.msra.mxu0 0.0
        %1543 = vmatpush.msra.mxu0 0.0
        %1544 = vmatpush.msra.mxu0 0.0
        %1545 = vmatpush.msra.mxu0 %v1508
        %1546 = vmatmul.f32.gmra.mxu0 %v1504
        %v1547 = vpop.f32.mrf.mxu0
        %v1548 = vadd.f32 0.0, %v1547
        %1549 = vdwg.mxu0
        %v1550 = vadd.f32 %v1483, %v1528
        %v1551 = vadd.f32 %v1484, %v1548
        %v1552 = vld [vmem:[#allocation2] sm:$0xff]
        %v1553 = vld [vmem:[#allocation2 + $0x8] sm:$0xf]
        %v1554 = vmul.f32 %v1552, %v924
        %v1555 = vmul.f32 %v1553, %v922
        %1558 = vst [vmem:[#allocation1] ss:$2 sm:$0xff] %v1554
        %s1559 = scalar_lea.vmem [#allocation1], 16
        %1560 = vst [vmem:[%s1559] ss:$2 sm:$0xff] %v1555
        %v1561 = vld.sshfl [vmem:[#allocation1] sm:$0xff pattern:$0x75316420]
        %v1562 = vld.sshfl [vmem:[#allocation1 + $0x8] sm:$0xff pattern:$0x75316420]
        %v1563 = vld.sshfl [vmem:[#allocation1 + $0x10] sm:$0xff pattern:$0x75316420]
        %1564 = vrot.lane.b32.xlu0 %v1561, 94
        %v1565 = vpop.permute.xlu0 %1564
        %1566 = vrot.lane.b32.xlu0 %v1562, 94
        %v1567 = vpop.permute.xlu0 %1566
        %1568 = vrot.lane.b32.xlu0 %v1563, 94
        %v1569 = vpop.permute.xlu0 %1568
        %v1570 = vsel %vm943, %v1565, %v1567
        %v1571 = vsel %vm943, %v1567, %v1569
        %v1573 = vsel %vm370, %v326, 0
        %v1575 = vsel %vm348, %v1570, 0
        %v1577 = vsel %vm348, %v1571, 0
        %1579 = vmatpush.msra.mxu0 0.0
        %1580 = vmatpush.msra.mxu0 0.0
        %1581 = vmatpush.msra.mxu0 0.0
        %1582 = vmatpush.msra.mxu0 0.0
        %1583 = vmatpush.msra.mxu0 0.0
        %1584 = vmatpush.msra.mxu0 0.0
        %1585 = vmatpush.msra.mxu0 0.0
        %1586 = vmatpush.msra.mxu0 0.0
        %1587 = vmatpush.msra.mxu0 0.0
        %1588 = vmatpush.msra.mxu0 0.0
        %1589 = vmatpush.msra.mxu0 0.0
        %1590 = vmatpush.msra.mxu0 0.0
        %1591 = vmatpush.msra.mxu0 0.0
        %1592 = vmatpush.msra.mxu0 0.0
        %1593 = vmatpush.msra.mxu0 0.0
        %1594 = vmatpush.msra.mxu0 %v1575
        %1595 = vmatmul.f32.gmra.mxu0 %v1573
        %v1596 = vpop.f32.mrf.mxu0
        %v1597 = vadd.f32 0.0, %v1596
        %1598 = vdwg.mxu0
        %1599 = vmatpush.msra.mxu0 0.0
        %1600 = vmatpush.msra.mxu0 0.0
        %1601 = vmatpush.msra.mxu0 0.0
        %1602 = vmatpush.msra.mxu0 0.0
        %1603 = vmatpush.msra.mxu0 0.0
        %1604 = vmatpush.msra.mxu0 0.0
        %1605 = vmatpush.msra.mxu0 0.0
        %1606 = vmatpush.msra.mxu0 0.0
        %1607 = vmatpush.msra.mxu0 0.0
        %1608 = vmatpush.msra.mxu0 0.0
        %1609 = vmatpush.msra.mxu0 0.0
        %1610 = vmatpush.msra.mxu0 0.0
        %1611 = vmatpush.msra.mxu0 0.0
        %1612 = vmatpush.msra.mxu0 0.0
        %1613 = vmatpush.msra.mxu0 0.0
        %1614 = vmatpush.msra.mxu0 %v1577
        %1615 = vmatmul.f32.gmra.mxu0 %v1573
        %v1616 = vpop.f32.mrf.mxu0
        %v1617 = vadd.f32 0.0, %v1616
        %1618 = vdwg.mxu0
        %v1619 = vadd.f32 %v1550, %v1597
        %v1620 = vadd.f32 %v1551, %v1617
        %v1621 = vld [vmem:[%s6] sm:$0xf]
        %1623 = vset.pattern.permute.xlu0 0
        %1624 = vperm.xlu0 %1623, %v1621
        %v1625 = vpop.permute.xlu0 %1624
        %v1627 = vmul.f32 %v1619, %v1625
        %v1628 = vmul.f32 %v1620, %v1625
        %v1629 = vld [vmem:[%s7] sm:$0xf]
        %1631 = vset.pattern.permute.xlu0 0
        %1632 = vperm.xlu0 %1631, %v1629
        %v1633 = vpop.permute.xlu0 %1632
        %v1635 = vadd.f32 %v1627, %v1633
        %v1636 = vadd.f32 %v1628, %v1633
        %1637 = vst [vmem:[#allocation1] ss:$2 sm:$0xff] %v308
        %v1638 = vld.sshfl [vmem:[#allocation1] sm:$0xff pattern:$0x75316420]
        %v1639 = vld.sshfl [vmem:[#allocation1 + $0x8] sm:$0xff pattern:$0x75316420]
        %v1642 = vadd.f32 %v1635, %v1638
        %v1643 = vadd.f32 %v1636, %v1639
        %v1644 = vmax.f32 %v1642, 0.0
        %v1645 = vmax.f32 %v1643, 0.0
        %v1648 = vrot.slane %v1645, 4
        %v1649 = vsel %vm348, %v1644, %v1648
        %1651 = vst [vmem:[%s298] sm:$0xff] %v1649
        %s1652 = sand.u32 %s203, 1
        %s1653 = scalar_lea.sflag [#allocation4], %s1652
        %s1654 = sand.u32 %s203, 1
        %s1655 = smul.addr %s1654, 8
        %s1656 = scalar_lea.vmem [#allocation3], %s1655
        // Predicated region
        $region53: #{tpu_custom_call.1} parent=51 // pred_check
          %p1657 = pneg %p213
        $region54: #{tpu_custom_call.1} parent=51 // pred_check_branch
          %1659 = sbr.rel (%p1657) target = $region56
        $region55: #{tpu_custom_call.1} parent=51 // pred_region
          %1661 = vsyncadd %s1653, 0
          %s1662 = smul.addr %s22, 2
          %s1663 = smul.addr %s1662, 4
          %s1664 = scalar_lea.hbm %s8, %s1663
          %s1666 = sshll.u32 %s1656, 4
          %s1667 = int_to_ptr.vmem [resolvable:$true] %s1666
          %s1668 = sshll.u32 %s1664, 4
          %s1669 = int_to_ptr.hbm [resolvable:$true] %s1668
          %1671 = dma.vmem_to_hbm [thread:$0]  %s1667, 128, %s1669, %s1653
        $region56: #{tpu_custom_call.1} parent=51 // pred_fallthru
          _
      $region52: #{tpu_custom_call.1} parent=5 // pred_fallthru
        _
      %p1672 = scmp.le.s32.totalorder 2, %s17
      // Predicated region
      $region57: #{tpu_custom_call.1} parent=5 // pred_check
        %p1673 = pneg %p1672
      $region58: #{tpu_custom_call.1} parent=5 // pred_check_branch
        %1675 = sbr.rel (%p1673) target = $region60
      $region59: #{tpu_custom_call.1} parent=5 // pred_region
        %s1676 = ssub.s32 %s17, 2
        // Predicated region
        $region61: #{tpu_custom_call.1} parent=59 // pred_check
          %p1677 = pneg %p219
        $region62: #{tpu_custom_call.1} parent=59 // pred_check_branch
          %1679 = sbr.rel (%p1677) target = $region64
        $region63: #{tpu_custom_call.1} parent=59 // pred_region
          %s1680 = sand.u32 %s204, 1
          %s1681 = scalar_lea.sflag [#allocation4], %s1680
          %s1682 = sand.u32 %s204, 1
          %s1683 = smul.addr %s1682, 8
          %s1684 = scalar_lea.vmem [#allocation3], %s1683
          %1686 = dma.done %s1681, 128
        $region64: #{tpu_custom_call.1} parent=59 // pred_fallthru
          _
      $region60: #{tpu_custom_call.1} parent=5 // pred_fallthru
        _
    $region6: #{tpu_custom_call.1} parent=1 // loop_footer
      %s21 = sadd.s32 1, %s17
    $region7: #{tpu_custom_call.1} parent=1 // loop_footer_branch
      %16 = sbr.rel target = $region3
    $region8: #{tpu_custom_call.1} parent=1 // loop_exit
      _
    %1687 = vsyncpa [#allocation4], 1
    %s1688 = scalar_lea.sflag [#allocation4], 1
    %1689 = vsyncpa %s1688, 1

</llo_original>
